<compile_context>
chip_gen: v5e
topology: v5e:2x2
jax: 0.10.0
libtpu: 0.0.40
codegen_flags: <defaults>
</compile_context>

<pallas_src>
import functools

import jax
import jax.numpy as jnp
from jax import lax
from jax.experimental import pallas as pl
from jax.experimental.pallas import tpu as pltpu

EPS = 1e-5
NEG_SLOPE = 0.2


def _unet_down_kernel(x_ref, w_ref, o_ref, *, cin, cout, ho, wo, row_chunk):
    """One batch element per grid step.

    x_ref: (4, Cin, (Ho+2)*(Wo+1))  phase-split zero-padded input.
           phase p = 2*(kh&1) + (kw&1); flat index f = r*(Wo+1) + s holds
           padded-input element (row 2r + (kh&1), col 2s + (kw&1)).
    w_ref: (16, Cout, Cin)          conv taps, k = kh*4 + kw.
    o_ref: (Cout, Ho*(Wo+1)) f32    "wide" output: column r*(Wo+1)+s is output
           pixel (ho=r, wo=s) for s < Wo; columns with s == Wo are bogus
           (masked out of the stats, dropped by the wrapper).
    """
    wo1 = wo + 1

    # ---- conv: 16 accumulated (Cout, Cin) @ (Cin, chunk) MXU matmuls ----
    for r0 in range(0, ho, row_chunk):
        rc = min(row_chunk, ho - r0)
        span = rc * wo1
        acc = jnp.zeros((cout, span), dtype=jnp.float32)
        for kh in range(4):
            for kw in range(4):
                p = (kh & 1) * 2 + (kw & 1)
                start = (r0 + kh // 2) * wo1 + (kw // 2)
                x_tap = x_ref[p, :, start:start + span]          # (Cin, span)
                w_tap = w_ref[kh * 4 + kw, :, :]                 # (Cout, Cin)
                acc = acc + jnp.dot(w_tap, x_tap,
                                    preferred_element_type=jnp.float32)
        o_ref[:, r0 * wo1:r0 * wo1 + span] = acc                 # lane-dense store

    # ---- InstanceNorm2d (affine=False, biased var, eps=1e-5) + LeakyReLU(0.2) ----
    y = o_ref[...]                                               # (Cout, Ho*Wo1) f32
    col = lax.broadcasted_iota(jnp.int32, y.shape, 1)
    valid = (col % wo1) < wo                                     # exclude bogus columns
    cnt = float(ho * wo)
    mean = jnp.sum(jnp.where(valid, y, 0.0), axis=1, keepdims=True) / cnt
    cen = y - mean
    var = jnp.sum(jnp.where(valid, cen * cen, 0.0), axis=1, keepdims=True) / cnt
    yn = cen * lax.rsqrt(var + EPS)
    o_ref[...] = jnp.where(yn >= 0, yn, NEG_SLOPE * yn).astype(o_ref.dtype)


def unet_down(x, weight, *, compute_dtype=jnp.bfloat16, row_chunk=None):
    """UNetDown forward.  x: (N, Cin, H, W), weight: (Cout, Cin, 4, 4) (PyTorch OIHW)."""
    N, Cin, H, W = x.shape
    Cout = weight.shape[0]
    assert H % 2 == 0 and W % 2 == 0, "k=4,s=2,p=1 path assumes even H, W"
    Ho, Wo = H // 2, W // 2
    Wo1 = Wo + 1            # one bogus output column per row -> contiguous tap slices
    R = Ho + 2              # halo row + one spare zero row (widest tap slice)

    if row_chunk is None:
        row_chunk = max(1, min(Ho, 2048 // Wo1))   # ~2K f32 lanes of accumulator / chunk

    # --- cheap layout prep: pad + parity split (1x input; NO im2col in HBM) ---
    xpad = jnp.pad(x.astype(compute_dtype), ((0, 0), (0, 0), (1, 3), (1, 1)))
    # rows -> (r, kh&1), cols -> (s, kw&1)  ==>  (N, 4, Cin, R*Wo1)
    xs = xpad.reshape(N, Cin, R, 2, Wo1, 2)
    xs = xs.transpose(0, 3, 5, 1, 2, 4).reshape(N, 4, Cin, R * Wo1)
    # conv taps as (16, Cout, Cin), k = kh*4 + kw
    w_taps = weight.astype(compute_dtype).transpose(2, 3, 0, 1).reshape(16, Cout, Cin)

    HWw = Ho * Wo1
    kernel = functools.partial(_unet_down_kernel, cin=Cin, cout=Cout,
                               ho=Ho, wo=Wo, row_chunk=row_chunk)

    # Explicit VMEM budget: double-buffered input/weight/output blocks + accumulator.
    in_b = 4 * Cin * R * Wo1 * jnp.dtype(compute_dtype).itemsize
    out_b = Cout * HWw * 4
    w_b = 16 * Cout * Cin * jnp.dtype(compute_dtype).itemsize
    acc_b = Cout * row_chunk * Wo1 * 4
    vmem_limit = int(min(64 << 20,
                         max(16 << 20, 2 * (in_b + out_b + w_b) + 4 * acc_b + (4 << 20))))

    out_wide = pl.pallas_call(
        kernel,
        out_shape=jax.ShapeDtypeStruct((N, Cout, HWw), jnp.float32),
        grid_spec=pltpu.PrefetchScalarGridSpec(
            num_scalar_prefetch=0,
            grid=(N,),
            in_specs=[
                pl.BlockSpec((None, 4, Cin, R * Wo1), lambda n: (n, 0, 0, 0)),
                pl.BlockSpec((16, Cout, Cin), lambda n: (0, 0, 0)),
            ],
            out_specs=pl.BlockSpec((None, Cout, HWw), lambda n: (n, 0, 0)),
        ),
        compiler_params=pltpu.CompilerParams(
            dimension_semantics=("parallel",),
            vmem_limit_bytes=vmem_limit,
        ),
    )(xs, w_taps)

    # (N, Cout, Ho*(Wo+1)) -> drop bogus column per row -> NCHW.  No transpose pass.
    return out_wide.reshape(N, Cout, Ho, Wo1)[:, :, :, :Wo]


def _reference(x, weight, compute_dtype=jnp.bfloat16):
    # Same precision recipe as the kernel: bf16 conv operands, f32 accumulation,
    # f32 InstanceNorm / LeakyReLU.
    y = lax.conv_general_dilated(
        x.astype(compute_dtype), weight.astype(compute_dtype),
        window_strides=(2, 2), padding=((1, 1), (1, 1)),
        dimension_numbers=("NCHW", "OIHW", "NCHW"),
        preferred_element_type=jnp.float32)
    mean = jnp.mean(y, axis=(2, 3), keepdims=True)
    var = jnp.mean((y - mean) ** 2, axis=(2, 3), keepdims=True)
    yn = (y - mean) * lax.rsqrt(var + EPS)
    return jnp.where(yn >= 0, yn, NEG_SLOPE * yn)


if __name__ == "__main__":
    key = jax.random.PRNGKey(0)
    kx, kw = jax.random.split(key)

    N, Cin, H, W = 2, 4, 16, 16
    Cout = 8  # UNetDown(in_size=4, out_size=8)

    x = jax.random.normal(kx, (N, Cin, H, W), dtype=jnp.float32)
    weight = jax.random.normal(kw, (Cout, Cin, 4, 4), dtype=jnp.float32) * 0.05

    out = unet_down(x, weight, row_chunk=4)   # row_chunk=4 exercises the chunk loop
    out = jax.block_until_ready(out)

    ref = _reference(x, weight)
    assert out.shape == (N, Cout, H // 2, W // 2), out.shape
    err = float(jnp.max(jnp.abs(out - ref)))
    assert jnp.allclose(out, ref, atol=1e-3, rtol=1e-3), err

    print("KERNEL_OK")
</pallas_src>

<mosaic_0001>
module attributes {stable_mosaic.version = 11 : i64} {
  func.func @_unet_down_kernel(%arg0: i32, %arg1: memref<1x4x4x90xbf16, #tpu.memory_space<vmem>>, %arg2: memref<16x8x4xbf16, #tpu.memory_space<vmem>>, %arg3: memref<1x8x72xf32, #tpu.memory_space<vmem>>) attributes {dimension_semantics = [#tpu.dimension_semantics<parallel>], iteration_bounds = array<i64: 2>, scalar_prefetch = 0 : i64, scratch_operands = 0 : i64, tpu.core_type = #tpu.core_type<tc>, window_params = [{transform_indices = @transform_0, window_bounds = array<i64: 1, 4, 4, 90>}, {pipeline_mode = #tpu.pipeline_mode<synchronous>, transform_indices = @transform_1, window_bounds = array<i64: 16, 8, 4>}, {transform_indices = @transform_2, window_bounds = array<i64: 1, 8, 72>}]} {
    %cst = arith.constant 0.000000e+00 : f32
    %0 = vector.broadcast %cst : f32 to vector<8x36xf32>
    %c0 = arith.constant 0 : index
    %c0_0 = arith.constant 0 : index
    %c0_1 = arith.constant 0 : index
    %c0_2 = arith.constant 0 : index
    %1 = vector.load %arg1[%c0, %c0_0, %c0_1, %c0_2] : memref<1x4x4x90xbf16, #tpu.memory_space<vmem>>, vector<1x1x4x36xbf16>
    %2 = vector.shape_cast %1 : vector<1x1x4x36xbf16> to vector<4x36xbf16>
    %c0_3 = arith.constant 0 : index
    %c0_4 = arith.constant 0 : index
    %c0_5 = arith.constant 0 : index
    %3 = vector.load %arg2[%c0_3, %c0_4, %c0_5] : memref<16x8x4xbf16, #tpu.memory_space<vmem>>, vector<1x8x4xbf16>
    %4 = vector.shape_cast %3 : vector<1x8x4xbf16> to vector<8x4xbf16>
    %cst_6 = arith.constant dense<0.000000e+00> : vector<8x36xf32>
    %5 = tpu.matmul %4, %2, %cst_6 {dimension_numbers = #tpu.dot_dimension_numbers<[1], [0], [0], [1], [0, 0, 1, 1], [], []>} : vector<8x4xbf16>, vector<4x36xbf16>, vector<8x36xf32> -> vector<8x36xf32>
    %6 = arith.addf %0, %5 : vector<8x36xf32>
    %c0_7 = arith.constant 0 : index
    %c1 = arith.constant 1 : index
    %c0_8 = arith.constant 0 : index
    %c0_9 = arith.constant 0 : index
    %7 = vector.load %arg1[%c0_7, %c1, %c0_8, %c0_9] : memref<1x4x4x90xbf16, #tpu.memory_space<vmem>>, vector<1x1x4x36xbf16>
    %8 = vector.shape_cast %7 : vector<1x1x4x36xbf16> to vector<4x36xbf16>
    %c1_10 = arith.constant 1 : index
    %c0_11 = arith.constant 0 : index
    %c0_12 = arith.constant 0 : index
    %9 = vector.load %arg2[%c1_10, %c0_11, %c0_12] : memref<16x8x4xbf16, #tpu.memory_space<vmem>>, vector<1x8x4xbf16>
    %10 = vector.shape_cast %9 : vector<1x8x4xbf16> to vector<8x4xbf16>
    %cst_13 = arith.constant dense<0.000000e+00> : vector<8x36xf32>
    %11 = tpu.matmul %10, %8, %cst_13 {dimension_numbers = #tpu.dot_dimension_numbers<[1], [0], [0], [1], [0, 0, 1, 1], [], []>} : vector<8x4xbf16>, vector<4x36xbf16>, vector<8x36xf32> -> vector<8x36xf32>
    %12 = arith.addf %6, %11 : vector<8x36xf32>
    %c0_14 = arith.constant 0 : index
    %c0_15 = arith.constant 0 : index
    %c0_16 = arith.constant 0 : index
    %c1_17 = arith.constant 1 : index
    %13 = vector.load %arg1[%c0_14, %c0_15, %c0_16, %c1_17] : memref<1x4x4x90xbf16, #tpu.memory_space<vmem>>, vector<1x1x4x36xbf16>
    %14 = vector.shape_cast %13 : vector<1x1x4x36xbf16> to vector<4x36xbf16>
    %c2 = arith.constant 2 : index
    %c0_18 = arith.constant 0 : index
    %c0_19 = arith.constant 0 : index
    %15 = vector.load %arg2[%c2, %c0_18, %c0_19] : memref<16x8x4xbf16, #tpu.memory_space<vmem>>, vector<1x8x4xbf16>
    %16 = vector.shape_cast %15 : vector<1x8x4xbf16> to vector<8x4xbf16>
    %cst_20 = arith.constant dense<0.000000e+00> : vector<8x36xf32>
    %17 = tpu.matmul %16, %14, %cst_20 {dimension_numbers = #tpu.dot_dimension_numbers<[1], [0], [0], [1], [0, 0, 1, 1], [], []>} : vector<8x4xbf16>, vector<4x36xbf16>, vector<8x36xf32> -> vector<8x36xf32>
    %18 = arith.addf %12, %17 : vector<8x36xf32>
    %c0_21 = arith.constant 0 : index
    %c1_22 = arith.constant 1 : index
    %c0_23 = arith.constant 0 : index
    %c1_24 = arith.constant 1 : index
    %19 = vector.load %arg1[%c0_21, %c1_22, %c0_23, %c1_24] : memref<1x4x4x90xbf16, #tpu.memory_space<vmem>>, vector<1x1x4x36xbf16>
    %20 = vector.shape_cast %19 : vector<1x1x4x36xbf16> to vector<4x36xbf16>
    %c3 = arith.constant 3 : index
    %c0_25 = arith.constant 0 : index
    %c0_26 = arith.constant 0 : index
    %21 = vector.load %arg2[%c3, %c0_25, %c0_26] : memref<16x8x4xbf16, #tpu.memory_space<vmem>>, vector<1x8x4xbf16>
    %22 = vector.shape_cast %21 : vector<1x8x4xbf16> to vector<8x4xbf16>
    %cst_27 = arith.constant dense<0.000000e+00> : vector<8x36xf32>
    %23 = tpu.matmul %22, %20, %cst_27 {dimension_numbers = #tpu.dot_dimension_numbers<[1], [0], [0], [1], [0, 0, 1, 1], [], []>} : vector<8x4xbf16>, vector<4x36xbf16>, vector<8x36xf32> -> vector<8x36xf32>
    %24 = arith.addf %18, %23 : vector<8x36xf32>
    %c0_28 = arith.constant 0 : index
    %c2_29 = arith.constant 2 : index
    %c0_30 = arith.constant 0 : index
    %c0_31 = arith.constant 0 : index
    %25 = vector.load %arg1[%c0_28, %c2_29, %c0_30, %c0_31] : memref<1x4x4x90xbf16, #tpu.memory_space<vmem>>, vector<1x1x4x36xbf16>
    %26 = vector.shape_cast %25 : vector<1x1x4x36xbf16> to vector<4x36xbf16>
    %c4 = arith.constant 4 : index
    %c0_32 = arith.constant 0 : index
    %c0_33 = arith.constant 0 : index
    %27 = vector.load %arg2[%c4, %c0_32, %c0_33] : memref<16x8x4xbf16, #tpu.memory_space<vmem>>, vector<1x8x4xbf16>
    %28 = vector.shape_cast %27 : vector<1x8x4xbf16> to vector<8x4xbf16>
    %cst_34 = arith.constant dense<0.000000e+00> : vector<8x36xf32>
    %29 = tpu.matmul %28, %26, %cst_34 {dimension_numbers = #tpu.dot_dimension_numbers<[1], [0], [0], [1], [0, 0, 1, 1], [], []>} : vector<8x4xbf16>, vector<4x36xbf16>, vector<8x36xf32> -> vector<8x36xf32>
    %30 = arith.addf %24, %29 : vector<8x36xf32>
    %c0_35 = arith.constant 0 : index
    %c3_36 = arith.constant 3 : index
    %c0_37 = arith.constant 0 : index
    %c0_38 = arith.constant 0 : index
    %31 = vector.load %arg1[%c0_35, %c3_36, %c0_37, %c0_38] : memref<1x4x4x90xbf16, #tpu.memory_space<vmem>>, vector<1x1x4x36xbf16>
    %32 = vector.shape_cast %31 : vector<1x1x4x36xbf16> to vector<4x36xbf16>
    %c5 = arith.constant 5 : index
    %c0_39 = arith.constant 0 : index
    %c0_40 = arith.constant 0 : index
    %33 = vector.load %arg2[%c5, %c0_39, %c0_40] : memref<16x8x4xbf16, #tpu.memory_space<vmem>>, vector<1x8x4xbf16>
    %34 = vector.shape_cast %33 : vector<1x8x4xbf16> to vector<8x4xbf16>
    %cst_41 = arith.constant dense<0.000000e+00> : vector<8x36xf32>
    %35 = tpu.matmul %34, %32, %cst_41 {dimension_numbers = #tpu.dot_dimension_numbers<[1], [0], [0], [1], [0, 0, 1, 1], [], []>} : vector<8x4xbf16>, vector<4x36xbf16>, vector<8x36xf32> -> vector<8x36xf32>
    %36 = arith.addf %30, %35 : vector<8x36xf32>
    %c0_42 = arith.constant 0 : index
    %c2_43 = arith.constant 2 : index
    %c0_44 = arith.constant 0 : index
    %c1_45 = arith.constant 1 : index
    %37 = vector.load %arg1[%c0_42, %c2_43, %c0_44, %c1_45] : memref<1x4x4x90xbf16, #tpu.memory_space<vmem>>, vector<1x1x4x36xbf16>
    %38 = vector.shape_cast %37 : vector<1x1x4x36xbf16> to vector<4x36xbf16>
    %c6 = arith.constant 6 : index
    %c0_46 = arith.constant 0 : index
    %c0_47 = arith.constant 0 : index
    %39 = vector.load %arg2[%c6, %c0_46, %c0_47] : memref<16x8x4xbf16, #tpu.memory_space<vmem>>, vector<1x8x4xbf16>
    %40 = vector.shape_cast %39 : vector<1x8x4xbf16> to vector<8x4xbf16>
    %cst_48 = arith.constant dense<0.000000e+00> : vector<8x36xf32>
    %41 = tpu.matmul %40, %38, %cst_48 {dimension_numbers = #tpu.dot_dimension_numbers<[1], [0], [0], [1], [0, 0, 1, 1], [], []>} : vector<8x4xbf16>, vector<4x36xbf16>, vector<8x36xf32> -> vector<8x36xf32>
    %42 = arith.addf %36, %41 : vector<8x36xf32>
    %c0_49 = arith.constant 0 : index
    %c3_50 = arith.constant 3 : index
    %c0_51 = arith.constant 0 : index
    %c1_52 = arith.constant 1 : index
    %43 = vector.load %arg1[%c0_49, %c3_50, %c0_51, %c1_52] : memref<1x4x4x90xbf16, #tpu.memory_space<vmem>>, vector<1x1x4x36xbf16>
    %44 = vector.shape_cast %43 : vector<1x1x4x36xbf16> to vector<4x36xbf16>
    %c7 = arith.constant 7 : index
    %c0_53 = arith.constant 0 : index
    %c0_54 = arith.constant 0 : index
    %45 = vector.load %arg2[%c7, %c0_53, %c0_54] : memref<16x8x4xbf16, #tpu.memory_space<vmem>>, vector<1x8x4xbf16>
    %46 = vector.shape_cast %45 : vector<1x8x4xbf16> to vector<8x4xbf16>
    %cst_55 = arith.constant dense<0.000000e+00> : vector<8x36xf32>
    %47 = tpu.matmul %46, %44, %cst_55 {dimension_numbers = #tpu.dot_dimension_numbers<[1], [0], [0], [1], [0, 0, 1, 1], [], []>} : vector<8x4xbf16>, vector<4x36xbf16>, vector<8x36xf32> -> vector<8x36xf32>
    %48 = arith.addf %42, %47 : vector<8x36xf32>
    %c0_56 = arith.constant 0 : index
    %c0_57 = arith.constant 0 : index
    %c0_58 = arith.constant 0 : index
    %c9 = arith.constant 9 : index
    %49 = vector.load %arg1[%c0_56, %c0_57, %c0_58, %c9] : memref<1x4x4x90xbf16, #tpu.memory_space<vmem>>, vector<1x1x4x36xbf16>
    %50 = vector.shape_cast %49 : vector<1x1x4x36xbf16> to vector<4x36xbf16>
    %c8 = arith.constant 8 : index
    %c0_59 = arith.constant 0 : index
    %c0_60 = arith.constant 0 : index
    %51 = vector.load %arg2[%c8, %c0_59, %c0_60] : memref<16x8x4xbf16, #tpu.memory_space<vmem>>, vector<1x8x4xbf16>
    %52 = vector.shape_cast %51 : vector<1x8x4xbf16> to vector<8x4xbf16>
    %cst_61 = arith.constant dense<0.000000e+00> : vector<8x36xf32>
    %53 = tpu.matmul %52, %50, %cst_61 {dimension_numbers = #tpu.dot_dimension_numbers<[1], [0], [0], [1], [0, 0, 1, 1], [], []>} : vector<8x4xbf16>, vector<4x36xbf16>, vector<8x36xf32> -> vector<8x36xf32>
    %54 = arith.addf %48, %53 : vector<8x36xf32>
    %c0_62 = arith.constant 0 : index
    %c1_63 = arith.constant 1 : index
    %c0_64 = arith.constant 0 : index
    %c9_65 = arith.constant 9 : index
    %55 = vector.load %arg1[%c0_62, %c1_63, %c0_64, %c9_65] : memref<1x4x4x90xbf16, #tpu.memory_space<vmem>>, vector<1x1x4x36xbf16>
    %56 = vector.shape_cast %55 : vector<1x1x4x36xbf16> to vector<4x36xbf16>
    %c9_66 = arith.constant 9 : index
    %c0_67 = arith.constant 0 : index
    %c0_68 = arith.constant 0 : index
    %57 = vector.load %arg2[%c9_66, %c0_67, %c0_68] : memref<16x8x4xbf16, #tpu.memory_space<vmem>>, vector<1x8x4xbf16>
    %58 = vector.shape_cast %57 : vector<1x8x4xbf16> to vector<8x4xbf16>
    %cst_69 = arith.constant dense<0.000000e+00> : vector<8x36xf32>
    %59 = tpu.matmul %58, %56, %cst_69 {dimension_numbers = #tpu.dot_dimension_numbers<[1], [0], [0], [1], [0, 0, 1, 1], [], []>} : vector<8x4xbf16>, vector<4x36xbf16>, vector<8x36xf32> -> vector<8x36xf32>
    %60 = arith.addf %54, %59 : vector<8x36xf32>
    %c0_70 = arith.constant 0 : index
    %c0_71 = arith.constant 0 : index
    %c0_72 = arith.constant 0 : index
    %c10 = arith.constant 10 : index
    %61 = vector.load %arg1[%c0_70, %c0_71, %c0_72, %c10] : memref<1x4x4x90xbf16, #tpu.memory_space<vmem>>, vector<1x1x4x36xbf16>
    %62 = vector.shape_cast %61 : vector<1x1x4x36xbf16> to vector<4x36xbf16>
    %c10_73 = arith.constant 10 : index
    %c0_74 = arith.constant 0 : index
    %c0_75 = arith.constant 0 : index
    %63 = vector.load %arg2[%c10_73, %c0_74, %c0_75] : memref<16x8x4xbf16, #tpu.memory_space<vmem>>, vector<1x8x4xbf16>
    %64 = vector.shape_cast %63 : vector<1x8x4xbf16> to vector<8x4xbf16>
    %cst_76 = arith.constant dense<0.000000e+00> : vector<8x36xf32>
    %65 = tpu.matmul %64, %62, %cst_76 {dimension_numbers = #tpu.dot_dimension_numbers<[1], [0], [0], [1], [0, 0, 1, 1], [], []>} : vector<8x4xbf16>, vector<4x36xbf16>, vector<8x36xf32> -> vector<8x36xf32>
    %66 = arith.addf %60, %65 : vector<8x36xf32>
    %c0_77 = arith.constant 0 : index
    %c1_78 = arith.constant 1 : index
    %c0_79 = arith.constant 0 : index
    %c10_80 = arith.constant 10 : index
    %67 = vector.load %arg1[%c0_77, %c1_78, %c0_79, %c10_80] : memref<1x4x4x90xbf16, #tpu.memory_space<vmem>>, vector<1x1x4x36xbf16>
    %68 = vector.shape_cast %67 : vector<1x1x4x36xbf16> to vector<4x36xbf16>
    %c11 = arith.constant 11 : index
    %c0_81 = arith.constant 0 : index
    %c0_82 = arith.constant 0 : index
    %69 = vector.load %arg2[%c11, %c0_81, %c0_82] : memref<16x8x4xbf16, #tpu.memory_space<vmem>>, vector<1x8x4xbf16>
    %70 = vector.shape_cast %69 : vector<1x8x4xbf16> to vector<8x4xbf16>
    %cst_83 = arith.constant dense<0.000000e+00> : vector<8x36xf32>
    %71 = tpu.matmul %70, %68, %cst_83 {dimension_numbers = #tpu.dot_dimension_numbers<[1], [0], [0], [1], [0, 0, 1, 1], [], []>} : vector<8x4xbf16>, vector<4x36xbf16>, vector<8x36xf32> -> vector<8x36xf32>
    %72 = arith.addf %66, %71 : vector<8x36xf32>
    %c0_84 = arith.constant 0 : index
    %c2_85 = arith.constant 2 : index
    %c0_86 = arith.constant 0 : index
    %c9_87 = arith.constant 9 : index
    %73 = vector.load %arg1[%c0_84, %c2_85, %c0_86, %c9_87] : memref<1x4x4x90xbf16, #tpu.memory_space<vmem>>, vector<1x1x4x36xbf16>
    %74 = vector.shape_cast %73 : vector<1x1x4x36xbf16> to vector<4x36xbf16>
    %c12 = arith.constant 12 : index
    %c0_88 = arith.constant 0 : index
    %c0_89 = arith.constant 0 : index
    %75 = vector.load %arg2[%c12, %c0_88, %c0_89] : memref<16x8x4xbf16, #tpu.memory_space<vmem>>, vector<1x8x4xbf16>
    %76 = vector.shape_cast %75 : vector<1x8x4xbf16> to vector<8x4xbf16>
    %cst_90 = arith.constant dense<0.000000e+00> : vector<8x36xf32>
    %77 = tpu.matmul %76, %74, %cst_90 {dimension_numbers = #tpu.dot_dimension_numbers<[1], [0], [0], [1], [0, 0, 1, 1], [], []>} : vector<8x4xbf16>, vector<4x36xbf16>, vector<8x36xf32> -> vector<8x36xf32>
    %78 = arith.addf %72, %77 : vector<8x36xf32>
    %c0_91 = arith.constant 0 : index
    %c3_92 = arith.constant 3 : index
    %c0_93 = arith.constant 0 : index
    %c9_94 = arith.constant 9 : index
    %79 = vector.load %arg1[%c0_91, %c3_92, %c0_93, %c9_94] : memref<1x4x4x90xbf16, #tpu.memory_space<vmem>>, vector<1x1x4x36xbf16>
    %80 = vector.shape_cast %79 : vector<1x1x4x36xbf16> to vector<4x36xbf16>
    %c13 = arith.constant 13 : index
    %c0_95 = arith.constant 0 : index
    %c0_96 = arith.constant 0 : index
    %81 = vector.load %arg2[%c13, %c0_95, %c0_96] : memref<16x8x4xbf16, #tpu.memory_space<vmem>>, vector<1x8x4xbf16>
    %82 = vector.shape_cast %81 : vector<1x8x4xbf16> to vector<8x4xbf16>
    %cst_97 = arith.constant dense<0.000000e+00> : vector<8x36xf32>
    %83 = tpu.matmul %82, %80, %cst_97 {dimension_numbers = #tpu.dot_dimension_numbers<[1], [0], [0], [1], [0, 0, 1, 1], [], []>} : vector<8x4xbf16>, vector<4x36xbf16>, vector<8x36xf32> -> vector<8x36xf32>
    %84 = arith.addf %78, %83 : vector<8x36xf32>
    %c0_98 = arith.constant 0 : index
    %c2_99 = arith.constant 2 : index
    %c0_100 = arith.constant 0 : index
    %c10_101 = arith.constant 10 : index
    %85 = vector.load %arg1[%c0_98, %c2_99, %c0_100, %c10_101] : memref<1x4x4x90xbf16, #tpu.memory_space<vmem>>, vector<1x1x4x36xbf16>
    %86 = vector.shape_cast %85 : vector<1x1x4x36xbf16> to vector<4x36xbf16>
    %c14 = arith.constant 14 : index
    %c0_102 = arith.constant 0 : index
    %c0_103 = arith.constant 0 : index
    %87 = vector.load %arg2[%c14, %c0_102, %c0_103] : memref<16x8x4xbf16, #tpu.memory_space<vmem>>, vector<1x8x4xbf16>
    %88 = vector.shape_cast %87 : vector<1x8x4xbf16> to vector<8x4xbf16>
    %cst_104 = arith.constant dense<0.000000e+00> : vector<8x36xf32>
    %89 = tpu.matmul %88, %86, %cst_104 {dimension_numbers = #tpu.dot_dimension_numbers<[1], [0], [0], [1], [0, 0, 1, 1], [], []>} : vector<8x4xbf16>, vector<4x36xbf16>, vector<8x36xf32> -> vector<8x36xf32>
    %90 = arith.addf %84, %89 : vector<8x36xf32>
    %c0_105 = arith.constant 0 : index
    %c3_106 = arith.constant 3 : index
    %c0_107 = arith.constant 0 : index
    %c10_108 = arith.constant 10 : index
    %91 = vector.load %arg1[%c0_105, %c3_106, %c0_107, %c10_108] : memref<1x4x4x90xbf16, #tpu.memory_space<vmem>>, vector<1x1x4x36xbf16>
    %92 = vector.shape_cast %91 : vector<1x1x4x36xbf16> to vector<4x36xbf16>
    %c15 = arith.constant 15 : index
    %c0_109 = arith.constant 0 : index
    %c0_110 = arith.constant 0 : index
    %93 = vector.load %arg2[%c15, %c0_109, %c0_110] : memref<16x8x4xbf16, #tpu.memory_space<vmem>>, vector<1x8x4xbf16>
    %94 = vector.shape_cast %93 : vector<1x8x4xbf16> to vector<8x4xbf16>
    %cst_111 = arith.constant dense<0.000000e+00> : vector<8x36xf32>
    %95 = tpu.matmul %94, %92, %cst_111 {dimension_numbers = #tpu.dot_dimension_numbers<[1], [0], [0], [1], [0, 0, 1, 1], [], []>} : vector<8x4xbf16>, vector<4x36xbf16>, vector<8x36xf32> -> vector<8x36xf32>
    %96 = arith.addf %90, %95 : vector<8x36xf32>
    %c0_112 = arith.constant 0 : index
    %c0_113 = arith.constant 0 : index
    %c0_114 = arith.constant 0 : index
    %97 = vector.load %arg3[%c0_112, %c0_113, %c0_114] : memref<1x8x72xf32, #tpu.memory_space<vmem>>, vector<1x8x36xf32>
    %98 = vector.shape_cast %97 : vector<1x8x36xf32> to vector<8x36xf32>
    %99 = vector.shape_cast %96 : vector<8x36xf32> to vector<1x8x36xf32>
    tpu.vector_store %arg3[%c0_112, %c0_113, %c0_114], %99 {strides = array<i32>} : memref<1x8x72xf32, #tpu.memory_space<vmem>>, vector<1x8x36xf32>,
    %cst_115 = arith.constant 0.000000e+00 : f32
    %100 = vector.broadcast %cst_115 : f32 to vector<8x36xf32>
    %c0_116 = arith.constant 0 : index
    %c0_117 = arith.constant 0 : index
    %c0_118 = arith.constant 0 : index
    %c36 = arith.constant 36 : index
    %101 = vector.load %arg1[%c0_116, %c0_117, %c0_118, %c36] : memref<1x4x4x90xbf16, #tpu.memory_space<vmem>>, vector<1x1x4x36xbf16>
    %102 = vector.shape_cast %101 : vector<1x1x4x36xbf16> to vector<4x36xbf16>
    %c0_119 = arith.constant 0 : index
    %c0_120 = arith.constant 0 : index
    %c0_121 = arith.constant 0 : index
    %103 = vector.load %arg2[%c0_119, %c0_120, %c0_121] : memref<16x8x4xbf16, #tpu.memory_space<vmem>>, vector<1x8x4xbf16>
    %104 = vector.shape_cast %103 : vector<1x8x4xbf16> to vector<8x4xbf16>
    %cst_122 = arith.constant dense<0.000000e+00> : vector<8x36xf32>
    %105 = tpu.matmul %104, %102, %cst_122 {dimension_numbers = #tpu.dot_dimension_numbers<[1], [0], [0], [1], [0, 0, 1, 1], [], []>} : vector<8x4xbf16>, vector<4x36xbf16>, vector<8x36xf32> -> vector<8x36xf32>
    %106 = arith.addf %100, %105 : vector<8x36xf32>
    %c0_123 = arith.constant 0 : index
    %c1_124 = arith.constant 1 : index
    %c0_125 = arith.constant 0 : index
    %c36_126 = arith.constant 36 : index
    %107 = vector.load %arg1[%c0_123, %c1_124, %c0_125, %c36_126] : memref<1x4x4x90xbf16, #tpu.memory_space<vmem>>, vector<1x1x4x36xbf16>
    %108 = vector.shape_cast %107 : vector<1x1x4x36xbf16> to vector<4x36xbf16>
    %c1_127 = arith.constant 1 : index
    %c0_128 = arith.constant 0 : index
    %c0_129 = arith.constant 0 : index
    %109 = vector.load %arg2[%c1_127, %c0_128, %c0_129] : memref<16x8x4xbf16, #tpu.memory_space<vmem>>, vector<1x8x4xbf16>
    %110 = vector.shape_cast %109 : vector<1x8x4xbf16> to vector<8x4xbf16>
    %cst_130 = arith.constant dense<0.000000e+00> : vector<8x36xf32>
    %111 = tpu.matmul %110, %108, %cst_130 {dimension_numbers = #tpu.dot_dimension_numbers<[1], [0], [0], [1], [0, 0, 1, 1], [], []>} : vector<8x4xbf16>, vector<4x36xbf16>, vector<8x36xf32> -> vector<8x36xf32>
    %112 = arith.addf %106, %111 : vector<8x36xf32>
    %c0_131 = arith.constant 0 : index
    %c0_132 = arith.constant 0 : index
    %c0_133 = arith.constant 0 : index
    %c37 = arith.constant 37 : index
    %113 = vector.load %arg1[%c0_131, %c0_132, %c0_133, %c37] : memref<1x4x4x90xbf16, #tpu.memory_space<vmem>>, vector<1x1x4x36xbf16>
    %114 = vector.shape_cast %113 : vector<1x1x4x36xbf16> to vector<4x36xbf16>
    %c2_134 = arith.constant 2 : index
    %c0_135 = arith.constant 0 : index
    %c0_136 = arith.constant 0 : index
    %115 = vector.load %arg2[%c2_134, %c0_135, %c0_136] : memref<16x8x4xbf16, #tpu.memory_space<vmem>>, vector<1x8x4xbf16>
    %116 = vector.shape_cast %115 : vector<1x8x4xbf16> to vector<8x4xbf16>
    %cst_137 = arith.constant dense<0.000000e+00> : vector<8x36xf32>
    %117 = tpu.matmul %116, %114, %cst_137 {dimension_numbers = #tpu.dot_dimension_numbers<[1], [0], [0], [1], [0, 0, 1, 1], [], []>} : vector<8x4xbf16>, vector<4x36xbf16>, vector<8x36xf32> -> vector<8x36xf32>
    %118 = arith.addf %112, %117 : vector<8x36xf32>
    %c0_138 = arith.constant 0 : index
    %c1_139 = arith.constant 1 : index
    %c0_140 = arith.constant 0 : index
    %c37_141 = arith.constant 37 : index
    %119 = vector.load %arg1[%c0_138, %c1_139, %c0_140, %c37_141] : memref<1x4x4x90xbf16, #tpu.memory_space<vmem>>, vector<1x1x4x36xbf16>
    %120 = vector.shape_cast %119 : vector<1x1x4x36xbf16> to vector<4x36xbf16>
    %c3_142 = arith.constant 3 : index
    %c0_143 = arith.constant 0 : index
    %c0_144 = arith.constant 0 : index
    %121 = vector.load %arg2[%c3_142, %c0_143, %c0_144] : memref<16x8x4xbf16, #tpu.memory_space<vmem>>, vector<1x8x4xbf16>
    %122 = vector.shape_cast %121 : vector<1x8x4xbf16> to vector<8x4xbf16>
    %cst_145 = arith.constant dense<0.000000e+00> : vector<8x36xf32>
    %123 = tpu.matmul %122, %120, %cst_145 {dimension_numbers = #tpu.dot_dimension_numbers<[1], [0], [0], [1], [0, 0, 1, 1], [], []>} : vector<8x4xbf16>, vector<4x36xbf16>, vector<8x36xf32> -> vector<8x36xf32>
    %124 = arith.addf %118, %123 : vector<8x36xf32>
    %c0_146 = arith.constant 0 : index
    %c2_147 = arith.constant 2 : index
    %c0_148 = arith.constant 0 : index
    %c36_149 = arith.constant 36 : index
    %125 = vector.load %arg1[%c0_146, %c2_147, %c0_148, %c36_149] : memref<1x4x4x90xbf16, #tpu.memory_space<vmem>>, vector<1x1x4x36xbf16>
    %126 = vector.shape_cast %125 : vector<1x1x4x36xbf16> to vector<4x36xbf16>
    %c4_150 = arith.constant 4 : index
    %c0_151 = arith.constant 0 : index
    %c0_152 = arith.constant 0 : index
    %127 = vector.load %arg2[%c4_150, %c0_151, %c0_152] : memref<16x8x4xbf16, #tpu.memory_space<vmem>>, vector<1x8x4xbf16>
    %128 = vector.shape_cast %127 : vector<1x8x4xbf16> to vector<8x4xbf16>
    %cst_153 = arith.constant dense<0.000000e+00> : vector<8x36xf32>
    %129 = tpu.matmul %128, %126, %cst_153 {dimension_numbers = #tpu.dot_dimension_numbers<[1], [0], [0], [1], [0, 0, 1, 1], [], []>} : vector<8x4xbf16>, vector<4x36xbf16>, vector<8x36xf32> -> vector<8x36xf32>
    %130 = arith.addf %124, %129 : vector<8x36xf32>
    %c0_154 = arith.constant 0 : index
    %c3_155 = arith.constant 3 : index
    %c0_156 = arith.constant 0 : index
    %c36_157 = arith.constant 36 : index
    %131 = vector.load %arg1[%c0_154, %c3_155, %c0_156, %c36_157] : memref<1x4x4x90xbf16, #tpu.memory_space<vmem>>, vector<1x1x4x36xbf16>
    %132 = vector.shape_cast %131 : vector<1x1x4x36xbf16> to vector<4x36xbf16>
    %c5_158 = arith.constant 5 : index
    %c0_159 = arith.constant 0 : index
    %c0_160 = arith.constant 0 : index
    %133 = vector.load %arg2[%c5_158, %c0_159, %c0_160] : memref<16x8x4xbf16, #tpu.memory_space<vmem>>, vector<1x8x4xbf16>
    %134 = vector.shape_cast %133 : vector<1x8x4xbf16> to vector<8x4xbf16>
    %cst_161 = arith.constant dense<0.000000e+00> : vector<8x36xf32>
    %135 = tpu.matmul %134, %132, %cst_161 {dimension_numbers = #tpu.dot_dimension_numbers<[1], [0], [0], [1], [0, 0, 1, 1], [], []>} : vector<8x4xbf16>, vector<4x36xbf16>, vector<8x36xf32> -> vector<8x36xf32>
    %136 = arith.addf %130, %135 : vector<8x36xf32>
    %c0_162 = arith.constant 0 : index
    %c2_163 = arith.constant 2 : index
    %c0_164 = arith.constant 0 : index
    %c37_165 = arith.constant 37 : index
    %137 = vector.load %arg1[%c0_162, %c2_163, %c0_164, %c37_165] : memref<1x4x4x90xbf16, #tpu.memory_space<vmem>>, vector<1x1x4x36xbf16>
    %138 = vector.shape_cast %137 : vector<1x1x4x36xbf16> to vector<4x36xbf16>
    %c6_166 = arith.constant 6 : index
    %c0_167 = arith.constant 0 : index
    %c0_168 = arith.constant 0 : index
    %139 = vector.load %arg2[%c6_166, %c0_167, %c0_168] : memref<16x8x4xbf16, #tpu.memory_space<vmem>>, vector<1x8x4xbf16>
    %140 = vector.shape_cast %139 : vector<1x8x4xbf16> to vector<8x4xbf16>
    %cst_169 = arith.constant dense<0.000000e+00> : vector<8x36xf32>
    %141 = tpu.matmul %140, %138, %cst_169 {dimension_numbers = #tpu.dot_dimension_numbers<[1], [0], [0], [1], [0, 0, 1, 1], [], []>} : vector<8x4xbf16>, vector<4x36xbf16>, vector<8x36xf32> -> vector<8x36xf32>
    %142 = arith.addf %136, %141 : vector<8x36xf32>
    %c0_170 = arith.constant 0 : index
    %c3_171 = arith.constant 3 : index
    %c0_172 = arith.constant 0 : index
    %c37_173 = arith.constant 37 : index
    %143 = vector.load %arg1[%c0_170, %c3_171, %c0_172, %c37_173] : memref<1x4x4x90xbf16, #tpu.memory_space<vmem>>, vector<1x1x4x36xbf16>
    %144 = vector.shape_cast %143 : vector<1x1x4x36xbf16> to vector<4x36xbf16>
    %c7_174 = arith.constant 7 : index
    %c0_175 = arith.constant 0 : index
    %c0_176 = arith.constant 0 : index
    %145 = vector.load %arg2[%c7_174, %c0_175, %c0_176] : memref<16x8x4xbf16, #tpu.memory_space<vmem>>, vector<1x8x4xbf16>
    %146 = vector.shape_cast %145 : vector<1x8x4xbf16> to vector<8x4xbf16>
    %cst_177 = arith.constant dense<0.000000e+00> : vector<8x36xf32>
    %147 = tpu.matmul %146, %144, %cst_177 {dimension_numbers = #tpu.dot_dimension_numbers<[1], [0], [0], [1], [0, 0, 1, 1], [], []>} : vector<8x4xbf16>, vector<4x36xbf16>, vector<8x36xf32> -> vector<8x36xf32>
    %148 = arith.addf %142, %147 : vector<8x36xf32>
    %c0_178 = arith.constant 0 : index
    %c0_179 = arith.constant 0 : index
    %c0_180 = arith.constant 0 : index
    %c45 = arith.constant 45 : index
    %149 = vector.load %arg1[%c0_178, %c0_179, %c0_180, %c45] : memref<1x4x4x90xbf16, #tpu.memory_space<vmem>>, vector<1x1x4x36xbf16>
    %150 = vector.shape_cast %149 : vector<1x1x4x36xbf16> to vector<4x36xbf16>
    %c8_181 = arith.constant 8 : index
    %c0_182 = arith.constant 0 : index
    %c0_183 = arith.constant 0 : index
    %151 = vector.load %arg2[%c8_181, %c0_182, %c0_183] : memref<16x8x4xbf16, #tpu.memory_space<vmem>>, vector<1x8x4xbf16>
    %152 = vector.shape_cast %151 : vector<1x8x4xbf16> to vector<8x4xbf16>
    %cst_184 = arith.constant dense<0.000000e+00> : vector<8x36xf32>
    %153 = tpu.matmul %152, %150, %cst_184 {dimension_numbers = #tpu.dot_dimension_numbers<[1], [0], [0], [1], [0, 0, 1, 1], [], []>} : vector<8x4xbf16>, vector<4x36xbf16>, vector<8x36xf32> -> vector<8x36xf32>
    %154 = arith.addf %148, %153 : vector<8x36xf32>
    %c0_185 = arith.constant 0 : index
    %c1_186 = arith.constant 1 : index
    %c0_187 = arith.constant 0 : index
    %c45_188 = arith.constant 45 : index
    %155 = vector.load %arg1[%c0_185, %c1_186, %c0_187, %c45_188] : memref<1x4x4x90xbf16, #tpu.memory_space<vmem>>, vector<1x1x4x36xbf16>
    %156 = vector.shape_cast %155 : vector<1x1x4x36xbf16> to vector<4x36xbf16>
    %c9_189 = arith.constant 9 : index
    %c0_190 = arith.constant 0 : index
    %c0_191 = arith.constant 0 : index
    %157 = vector.load %arg2[%c9_189, %c0_190, %c0_191] : memref<16x8x4xbf16, #tpu.memory_space<vmem>>, vector<1x8x4xbf16>
    %158 = vector.shape_cast %157 : vector<1x8x4xbf16> to vector<8x4xbf16>
    %cst_192 = arith.constant dense<0.000000e+00> : vector<8x36xf32>
    %159 = tpu.matmul %158, %156, %cst_192 {dimension_numbers = #tpu.dot_dimension_numbers<[1], [0], [0], [1], [0, 0, 1, 1], [], []>} : vector<8x4xbf16>, vector<4x36xbf16>, vector<8x36xf32> -> vector<8x36xf32>
    %160 = arith.addf %154, %159 : vector<8x36xf32>
    %c0_193 = arith.constant 0 : index
    %c0_194 = arith.constant 0 : index
    %c0_195 = arith.constant 0 : index
    %c46 = arith.constant 46 : index
    %161 = vector.load %arg1[%c0_193, %c0_194, %c0_195, %c46] : memref<1x4x4x90xbf16, #tpu.memory_space<vmem>>, vector<1x1x4x36xbf16>
    %162 = vector.shape_cast %161 : vector<1x1x4x36xbf16> to vector<4x36xbf16>
    %c10_196 = arith.constant 10 : index
    %c0_197 = arith.constant 0 : index
    %c0_198 = arith.constant 0 : index
    %163 = vector.load %arg2[%c10_196, %c0_197, %c0_198] : memref<16x8x4xbf16, #tpu.memory_space<vmem>>, vector<1x8x4xbf16>
    %164 = vector.shape_cast %163 : vector<1x8x4xbf16> to vector<8x4xbf16>
    %cst_199 = arith.constant dense<0.000000e+00> : vector<8x36xf32>
    %165 = tpu.matmul %164, %162, %cst_199 {dimension_numbers = #tpu.dot_dimension_numbers<[1], [0], [0], [1], [0, 0, 1, 1], [], []>} : vector<8x4xbf16>, vector<4x36xbf16>, vector<8x36xf32> -> vector<8x36xf32>
    %166 = arith.addf %160, %165 : vector<8x36xf32>
    %c0_200 = arith.constant 0 : index
    %c1_201 = arith.constant 1 : index
    %c0_202 = arith.constant 0 : index
    %c46_203 = arith.constant 46 : index
    %167 = vector.load %arg1[%c0_200, %c1_201, %c0_202, %c46_203] : memref<1x4x4x90xbf16, #tpu.memory_space<vmem>>, vector<1x1x4x36xbf16>
    %168 = vector.shape_cast %167 : vector<1x1x4x36xbf16> to vector<4x36xbf16>
    %c11_204 = arith.constant 11 : index
    %c0_205 = arith.constant 0 : index
    %c0_206 = arith.constant 0 : index
    %169 = vector.load %arg2[%c11_204, %c0_205, %c0_206] : memref<16x8x4xbf16, #tpu.memory_space<vmem>>, vector<1x8x4xbf16>
    %170 = vector.shape_cast %169 : vector<1x8x4xbf16> to vector<8x4xbf16>
    %cst_207 = arith.constant dense<0.000000e+00> : vector<8x36xf32>
    %171 = tpu.matmul %170, %168, %cst_207 {dimension_numbers = #tpu.dot_dimension_numbers<[1], [0], [0], [1], [0, 0, 1, 1], [], []>} : vector<8x4xbf16>, vector<4x36xbf16>, vector<8x36xf32> -> vector<8x36xf32>
    %172 = arith.addf %166, %171 : vector<8x36xf32>
    %c0_208 = arith.constant 0 : index
    %c2_209 = arith.constant 2 : index
    %c0_210 = arith.constant 0 : index
    %c45_211 = arith.constant 45 : index
    %173 = vector.load %arg1[%c0_208, %c2_209, %c0_210, %c45_211] : memref<1x4x4x90xbf16, #tpu.memory_space<vmem>>, vector<1x1x4x36xbf16>
    %174 = vector.shape_cast %173 : vector<1x1x4x36xbf16> to vector<4x36xbf16>
    %c12_212 = arith.constant 12 : index
    %c0_213 = arith.constant 0 : index
    %c0_214 = arith.constant 0 : index
    %175 = vector.load %arg2[%c12_212, %c0_213, %c0_214] : memref<16x8x4xbf16, #tpu.memory_space<vmem>>, vector<1x8x4xbf16>
    %176 = vector.shape_cast %175 : vector<1x8x4xbf16> to vector<8x4xbf16>
    %cst_215 = arith.constant dense<0.000000e+00> : vector<8x36xf32>
    %177 = tpu.matmul %176, %174, %cst_215 {dimension_numbers = #tpu.dot_dimension_numbers<[1], [0], [0], [1], [0, 0, 1, 1], [], []>} : vector<8x4xbf16>, vector<4x36xbf16>, vector<8x36xf32> -> vector<8x36xf32>
    %178 = arith.addf %172, %177 : vector<8x36xf32>
    %c0_216 = arith.constant 0 : index
    %c3_217 = arith.constant 3 : index
    %c0_218 = arith.constant 0 : index
    %c45_219 = arith.constant 45 : index
    %179 = vector.load %arg1[%c0_216, %c3_217, %c0_218, %c45_219] : memref<1x4x4x90xbf16, #tpu.memory_space<vmem>>, vector<1x1x4x36xbf16>
    %180 = vector.shape_cast %179 : vector<1x1x4x36xbf16> to vector<4x36xbf16>
    %c13_220 = arith.constant 13 : index
    %c0_221 = arith.constant 0 : index
    %c0_222 = arith.constant 0 : index
    %181 = vector.load %arg2[%c13_220, %c0_221, %c0_222] : memref<16x8x4xbf16, #tpu.memory_space<vmem>>, vector<1x8x4xbf16>
    %182 = vector.shape_cast %181 : vector<1x8x4xbf16> to vector<8x4xbf16>
    %cst_223 = arith.constant dense<0.000000e+00> : vector<8x36xf32>
    %183 = tpu.matmul %182, %180, %cst_223 {dimension_numbers = #tpu.dot_dimension_numbers<[1], [0], [0], [1], [0, 0, 1, 1], [], []>} : vector<8x4xbf16>, vector<4x36xbf16>, vector<8x36xf32> -> vector<8x36xf32>
    %184 = arith.addf %178, %183 : vector<8x36xf32>
    %c0_224 = arith.constant 0 : index
    %c2_225 = arith.constant 2 : index
    %c0_226 = arith.constant 0 : index
    %c46_227 = arith.constant 46 : index
    %185 = vector.load %arg1[%c0_224, %c2_225, %c0_226, %c46_227] : memref<1x4x4x90xbf16, #tpu.memory_space<vmem>>, vector<1x1x4x36xbf16>
    %186 = vector.shape_cast %185 : vector<1x1x4x36xbf16> to vector<4x36xbf16>
    %c14_228 = arith.constant 14 : index
    %c0_229 = arith.constant 0 : index
    %c0_230 = arith.constant 0 : index
    %187 = vector.load %arg2[%c14_228, %c0_229, %c0_230] : memref<16x8x4xbf16, #tpu.memory_space<vmem>>, vector<1x8x4xbf16>
    %188 = vector.shape_cast %187 : vector<1x8x4xbf16> to vector<8x4xbf16>
    %cst_231 = arith.constant dense<0.000000e+00> : vector<8x36xf32>
    %189 = tpu.matmul %188, %186, %cst_231 {dimension_numbers = #tpu.dot_dimension_numbers<[1], [0], [0], [1], [0, 0, 1, 1], [], []>} : vector<8x4xbf16>, vector<4x36xbf16>, vector<8x36xf32> -> vector<8x36xf32>
    %190 = arith.addf %184, %189 : vector<8x36xf32>
    %c0_232 = arith.constant 0 : index
    %c3_233 = arith.constant 3 : index
    %c0_234 = arith.constant 0 : index
    %c46_235 = arith.constant 46 : index
    %191 = vector.load %arg1[%c0_232, %c3_233, %c0_234, %c46_235] : memref<1x4x4x90xbf16, #tpu.memory_space<vmem>>, vector<1x1x4x36xbf16>
    %192 = vector.shape_cast %191 : vector<1x1x4x36xbf16> to vector<4x36xbf16>
    %c15_236 = arith.constant 15 : index
    %c0_237 = arith.constant 0 : index
    %c0_238 = arith.constant 0 : index
    %193 = vector.load %arg2[%c15_236, %c0_237, %c0_238] : memref<16x8x4xbf16, #tpu.memory_space<vmem>>, vector<1x8x4xbf16>
    %194 = vector.shape_cast %193 : vector<1x8x4xbf16> to vector<8x4xbf16>
    %cst_239 = arith.constant dense<0.000000e+00> : vector<8x36xf32>
    %195 = tpu.matmul %194, %192, %cst_239 {dimension_numbers = #tpu.dot_dimension_numbers<[1], [0], [0], [1], [0, 0, 1, 1], [], []>} : vector<8x4xbf16>, vector<4x36xbf16>, vector<8x36xf32> -> vector<8x36xf32>
    %196 = arith.addf %190, %195 : vector<8x36xf32>
    %c0_240 = arith.constant 0 : index
    %c0_241 = arith.constant 0 : index
    %c36_242 = arith.constant 36 : index
    %197 = vector.load %arg3[%c0_240, %c0_241, %c36_242] : memref<1x8x72xf32, #tpu.memory_space<vmem>>, vector<1x8x36xf32>
    %198 = vector.shape_cast %197 : vector<1x8x36xf32> to vector<8x36xf32>
    %199 = vector.shape_cast %196 : vector<8x36xf32> to vector<1x8x36xf32>
    tpu.vector_store %arg3[%c0_240, %c0_241, %c36_242], %199 {strides = array<i32>} : memref<1x8x72xf32, #tpu.memory_space<vmem>>, vector<1x8x36xf32>,
    %c0_243 = arith.constant 0 : index
    %c0_244 = arith.constant 0 : index
    %c0_245 = arith.constant 0 : index
    %200 = vector.load %arg3[%c0_243, %c0_244, %c0_245] : memref<1x8x72xf32, #tpu.memory_space<vmem>>, vector<1x8x72xf32>
    %201 = vector.shape_cast %200 : vector<1x8x72xf32> to vector<8x72xf32>
    %202 = tpu.iota {dimensions = array<i32: 1>} : vector<8x72xi32>
    %c9_i32 = arith.constant 9 : i32
    %c0_i32 = arith.constant 0 : i32
    %203 = arith.cmpi eq, %c9_i32, %c0_i32 : i32
    %c1_i32 = arith.constant 1 : i32
    %204 = arith.select %203, %c1_i32, %c9_i32 : i32
    %205 = vector.broadcast %204 : i32 to vector<8x72xi32>
    %206 = arith.remsi %202, %205 : vector<8x72xi32>
    %c0_i32_246 = arith.constant 0 : i32
    %207 = vector.broadcast %c0_i32_246 : i32 to vector<8x72xi32>
    %208 = arith.cmpi ne, %206, %207 : vector<8x72xi32>
    %c0_i32_247 = arith.constant 0 : i32
    %209 = vector.broadcast %c0_i32_247 : i32 to vector<8x72xi32>
    %210 = arith.cmpi slt, %206, %209 : vector<8x72xi32>
    %c0_i32_248 = arith.constant 0 : i32
    %211 = arith.cmpi slt, %204, %c0_i32_248 : i32
    %212 = vector.broadcast %211 : i1 to vector<8x72xi1>
    %213 = vector.broadcast %212 : vector<8x72xi1> to vector<8x72xi1>
    %214 = arith.xori %210, %213 : vector<8x72xi1>
    %215 = arith.andi %214, %208 : vector<8x72xi1>
    %216 = vector.broadcast %204 : i32 to vector<8x72xi32>
    %217 = arith.addi %206, %216 : vector<8x72xi32>
    %218 = arith.select %215, %217, %206 : vector<8x72xi1>, vector<8x72xi32>
    %c8_i32 = arith.constant 8 : i32
    %219 = vector.broadcast %c8_i32 : i32 to vector<8x72xi32>
    %220 = arith.cmpi slt, %218, %219 : vector<8x72xi32>
    %cst_249 = arith.constant 0.000000e+00 : f32
    %221 = vector.broadcast %cst_249 : f32 to vector<8x72xf32>
    %222 = arith.select %220, %201, %221 : vector<8x72xi1>, vector<8x72xf32>
    %cst_250 = arith.constant dense<0.000000e+00> : vector<8xf32>
    %223 = vector.multi_reduction <add>, %222, %cst_250 [1] : vector<8x72xf32> to vector<8xf32>
    %224 = vector.shape_cast %223 : vector<8xf32> to vector<8x1xf32>
    %cst_251 = arith.constant 6.400000e+01 : f32
    %225 = vector.broadcast %cst_251 : f32 to vector<8x1xf32>
    %226 = arith.divf %224, %225 : vector<8x1xf32>
    %227 = vector.broadcast %226 : vector<8x1xf32> to vector<8x72xf32>
    %228 = arith.subf %201, %227 : vector<8x72xf32>
    %229 = arith.mulf %228, %228 : vector<8x72xf32>
    %cst_252 = arith.constant 0.000000e+00 : f32
    %230 = vector.broadcast %cst_252 : f32 to vector<8x72xf32>
    %231 = arith.select %220, %229, %230 : vector<8x72xi1>, vector<8x72xf32>
    %cst_253 = arith.constant dense<0.000000e+00> : vector<8xf32>
    %232 = vector.multi_reduction <add>, %231, %cst_253 [1] : vector<8x72xf32> to vector<8xf32>
    %233 = vector.shape_cast %232 : vector<8xf32> to vector<8x1xf32>
    %cst_254 = arith.constant 6.400000e+01 : f32
    %234 = vector.broadcast %cst_254 : f32 to vector<8x1xf32>
    %235 = arith.divf %233, %234 : vector<8x1xf32>
    %cst_255 = arith.constant 9.99999974E-6 : f32
    %236 = vector.broadcast %cst_255 : f32 to vector<8x1xf32>
    %237 = arith.addf %235, %236 : vector<8x1xf32>
    %238 = math.rsqrt %237 : vector<8x1xf32>
    %239 = vector.broadcast %238 : vector<8x1xf32> to vector<8x72xf32>
    %240 = arith.mulf %228, %239 : vector<8x72xf32>
    %cst_256 = arith.constant 0.000000e+00 : f32
    %241 = vector.broadcast %cst_256 : f32 to vector<8x72xf32>
    %242 = arith.cmpf oge, %240, %241 : vector<8x72xf32>
    %cst_257 = arith.constant 2.000000e-01 : f32
    %243 = vector.broadcast %cst_257 : f32 to vector<8x72xf32>
    %244 = arith.mulf %243, %240 : vector<8x72xf32>
    %245 = arith.select %242, %240, %244 : vector<8x72xi1>, vector<8x72xf32>
    %c0_258 = arith.constant 0 : index
    %c0_259 = arith.constant 0 : index
    %c0_260 = arith.constant 0 : index
    %246 = vector.load %arg3[%c0_258, %c0_259, %c0_260] : memref<1x8x72xf32, #tpu.memory_space<vmem>>, vector<1x8x72xf32>
    %247 = vector.shape_cast %246 : vector<1x8x72xf32> to vector<8x72xf32>
    %248 = vector.shape_cast %245 : vector<8x72xf32> to vector<1x8x72xf32>
    tpu.vector_store %arg3[%c0_258, %c0_259, %c0_260], %248 {strides = array<i32>} : memref<1x8x72xf32, #tpu.memory_space<vmem>>, vector<1x8x72xf32>,
    return
  }
  func.func @transform_0(%arg0: i32) -> (i32, i32, i32, i32) {
    %c0_i32 = arith.constant 0 : i32
    %c0_i32_0 = arith.constant 0 : i32
    %c0_i32_1 = arith.constant 0 : i32
    %c0_i32_2 = arith.constant 0 : i32
    return %arg0, %c0_i32, %c0_i32_0, %c0_i32_1 : i32, i32, i32, i32
  }
  func.func @transform_1(%arg0: i32) -> (i32, i32, i32) {
    %c0_i32 = arith.constant 0 : i32
    %c0_i32_0 = arith.constant 0 : i32
    %c0_i32_1 = arith.constant 0 : i32
    %c0_i32_2 = arith.constant 0 : i32
    return %c0_i32, %c0_i32_0, %c0_i32_1 : i32, i32, i32
  }
  func.func @transform_2(%arg0: i32) -> (i32, i32, i32) {
    %c0_i32 = arith.constant 0 : i32
    %c0_i32_0 = arith.constant 0 : i32
    %c0_i32_1 = arith.constant 0 : i32
    return %arg0, %c0_i32, %c0_i32_0 : i32, i32, i32
  }
}

</mosaic_0001>

<llo_original>
// kernel: tpu_custom_call.1
$region0: #{tpu_custom_call.1}
  #allocation0 [shape = 'u32[]', space=smem, size = 0x4, offset = 0x4, fixed_abs, tag = 'smem constant byte address 0x4 - core index']
  #allocation1 [shape = 'u32[72,128]{1,0:T(1,128)}', space=vmem, size = 0x9000, scoped, tag = 'internal scratch']
  %s0 = inlined_call_operand.vmem [shape: bf16[2,4,4,90], index: 0, kind: input, shape index: {}]
  %s1 = inlined_call_operand.vmem [shape: bf16[16,8,4], index: 1, kind: input, shape index: {}]
  %s2 = inlined_call_operand.hbm [shape: f32[2,8,72], index: 2, kind: output, shape index: {}]
  %s3 = sld [smem:[#allocation0]]
  $region41: #{tpu_custom_call.1} parent=0
    _
  %s5 = ssub.s32 1, %s3
  %s6 = scalar_select 0, %s5, %s3
  $region1: #{tpu_custom_call.1} parent=0
    #allocation2 [shape = 'u8[8192]{0}', space=vmem, size = 0x2000, scoped, tag = 'output window, operand 0']
    #allocation3 [shape = 's32[2]{0}', space=sflag, size = 0x8, scoped, tag = 'scoped memory for tpu_custom_call.1']
    %7 = vsyncpa [#allocation3], 0
    %s8 = scalar_lea.sflag [#allocation3], 1
    %9 = vsyncpa %s8, 0
    loop: start=0, step=1, limit=4
    $region2: #{tpu_custom_call.1} parent=1 // loop_pre_header
      _
    $region3: #{tpu_custom_call.1} parent=1 // loop_header
      %s11 = sphi 0, %s15
      %p12 = scmp.ge.s32.totalorder %s11, 4
      %s21 = sphi 0, %s23
      %s24 = sphi 0, %s21
      %s25 = sphi 0, %s24
      %s41 = sphi 0, %s25
      %s45 = sphi 0, %s45
      %s47 = sphi 0, %s45
      %s48 = sphi 0, %s47
      %s62 = sphi 0, %s48
      %s68 = sphi 0, %s70
      %s71 = sphi 0, %s68
      %s72 = sphi 0, %s71
      %s88 = sphi 0, %s72
    $region4: #{tpu_custom_call.1} parent=1 // loop_header_branch
      %14 = sbr.rel (%p12) target = $region8
    $region5: #{tpu_custom_call.1} parent=1 // loop_body
      %s16 = ssub.s32 %s11, 1
      %s17 = ssub.s32 %s11, 2
      %s18 = sadd.s32 %s11, 1
      %s19 = ssub.s32 %s11, %s18
      %p20 = scmp.eq.s32.totalorder %s19, 0
      %s22 = sadd.s32 %s21, 1
      %s23 = scalar_select %p20, %s21, %s22
      %p26 = pneg %p20
      %p27 = scmp.eq.s32.totalorder %s11, 1
      %p28 = por %p26, %p27
      %p29 = scmp.ne.s32.totalorder %s21, %s24
      %p30 = scmp.eq.s32.totalorder %s11, 0
      %p31 = por %p29, %p30
      %p32 = scmp.ne.s32.totalorder %s21, %s24
      %p33 = scmp.eq.s32.totalorder %s16, 1
      %p34 = por %p32, %p33
      %p35 = scmp.ne.s32.totalorder %s24, %s25
      %p36 = scmp.eq.s32.totalorder %s16, 0
      %p37 = por %p35, %p36
      %p38 = scmp.ne.s32.totalorder %s24, %s25
      %p39 = scmp.eq.s32.totalorder %s17, 1
      %p40 = por %p38, %p39
      %p42 = scmp.ne.s32.totalorder %s25, %s41
      %p43 = scmp.eq.s32.totalorder %s17, 0
      %p44 = por %p42, %p43
      %s46 = sadd.s32 %s45, 1
      %p49 = scmp.eq.s32.totalorder %s11, 1
      %p50 = scmp.ne.s32.totalorder %s45, %s47
      %p51 = scmp.eq.s32.totalorder %s11, 0
      %p52 = por %p50, %p51
      %p53 = scmp.ne.s32.totalorder %s45, %s47
      %p54 = scmp.eq.s32.totalorder %s16, 1
      %p55 = por %p53, %p54
      %p56 = scmp.ne.s32.totalorder %s47, %s48
      %p57 = scmp.eq.s32.totalorder %s16, 0
      %p58 = por %p56, %p57
      %p59 = scmp.ne.s32.totalorder %s47, %s48
      %p60 = scmp.eq.s32.totalorder %s17, 1
      %p61 = por %p59, %p60
      %p63 = scmp.ne.s32.totalorder %s48, %s62
      %p64 = scmp.eq.s32.totalorder %s17, 0
      %p65 = por %p63, %p64
      %s66 = ssub.s32 %s11, %s18
      %p67 = scmp.eq.s32.totalorder %s66, 0
      %s69 = sadd.s32 %s68, 1
      %s70 = scalar_select %p67, %s68, %s69
      %p73 = pneg %p67
      %p74 = scmp.eq.s32.totalorder %s11, 1
      %p75 = por %p73, %p74
      %p76 = scmp.ne.s32.totalorder %s68, %s71
      %p77 = scmp.eq.s32.totalorder %s11, 0
      %p78 = por %p76, %p77
      %p79 = scmp.ne.s32.totalorder %s68, %s71
      %p80 = scmp.eq.s32.totalorder %s16, 1
      %p81 = por %p79, %p80
      %p82 = scmp.ne.s32.totalorder %s71, %s72
      %p83 = scmp.eq.s32.totalorder %s16, 0
      %p84 = por %p82, %p83
      %p85 = scmp.ne.s32.totalorder %s71, %s72
      %p86 = scmp.eq.s32.totalorder %s17, 1
      %p87 = por %p85, %p86
      %p89 = scmp.ne.s32.totalorder %s72, %s88
      %p90 = scmp.eq.s32.totalorder %s17, 0
      %p91 = por %p89, %p90
      %p92 = scmp.le.s32.totalorder 1, %s11
      %p93 = scmp.lt.s32.totalorder %s11, 3
      %p94 = pnand %p92, %p93
      %p95 = pneg %p94
      // Predicated region
      $region9: #{tpu_custom_call.1} parent=5 // pred_check
        _
      $region10: #{tpu_custom_call.1} parent=5 // pred_check_branch
        %97 = sbr.rel (%p94) target = $region12
      $region11: #{tpu_custom_call.1} parent=5 // pred_region
        %s98 = ssub.s32 %s11, 1
        // Predicated region
        $region13: #{tpu_custom_call.1} parent=11 // pred_check
          %p99 = pneg %p58
        $region14: #{tpu_custom_call.1} parent=11 // pred_check_branch
          %101 = sbr.rel (%p99) target = $region16
        $region15: #{tpu_custom_call.1} parent=11 // pred_region
          _
        $region16: #{tpu_custom_call.1} parent=11 // pred_fallthru
          _
      $region12: #{tpu_custom_call.1} parent=5 // pred_fallthru
        _
      %p102 = scmp.lt.s32.totalorder %s11, 2
      // Predicated region
      $region17: #{tpu_custom_call.1} parent=5 // pred_check
        %p103 = pneg %p102
      $region18: #{tpu_custom_call.1} parent=5 // pred_check_branch
        %105 = sbr.rel (%p103) target = $region20
      $region19: #{tpu_custom_call.1} parent=5 // pred_region
        // Predicated region
        $region21: #{tpu_custom_call.1} parent=19 // pred_check
          %p106 = pneg %p31
        $region22: #{tpu_custom_call.1} parent=19 // pred_check_branch
          %108 = sbr.rel (%p106) target = $region24
        $region23: #{tpu_custom_call.1} parent=19 // pred_region
          %p109 = scmp.lt.s32.totalorder %s11, 1
          %s110 = scalar_select %p109, %s11, 1
          %s111 = smul.addr %s110, 4
          %s112 = smul.addr %s111, 2
          %s113 = scalar_lea.vmem %s0, %s112
        $region24: #{tpu_custom_call.1} parent=19 // pred_fallthru
          _
      $region20: #{tpu_custom_call.1} parent=5 // pred_fallthru
        _
      %p114 = scmp.le.s32.totalorder 1, %s11
      %p115 = scmp.lt.s32.totalorder %s11, 3
      %p116 = pnand %p114, %p115
      %p117 = pneg %p116
      // Predicated region
      $region25: #{tpu_custom_call.1} parent=5 // pred_check
        _
      $region26: #{tpu_custom_call.1} parent=5 // pred_check_branch
        %119 = sbr.rel (%p116) target = $region28
      $region27: #{tpu_custom_call.1} parent=5 // pred_region
        %s120 = ssub.s32 %s11, 1
        %p121 = scmp.lt.s32.totalorder %s16, 1
        %s122 = scalar_select %p121, %s16, 1
        %s123 = smul.addr %s122, 4
        %s124 = smul.addr %s123, 2
        %s125 = scalar_lea.vmem %s0, %s124
        %p126 = pneg %p37
        %p127 = pneg %p34
        %p128 = pneg %p58
        %p129 = pneg %p55
        %p130 = pneg %p84
        %p131 = pneg %p81
        %s132 = sand.u32 %s71, 1
        %s133 = scalar_lea.sflag [#allocation3], %s132
        %s134 = sand.u32 %s71, 1
        %s135 = smul.addr %s134, 8
        %s136 = scalar_lea.vmem [#allocation2], %s135
        %p137 = scmp.lt.s32.totalorder %s16, 1
        %s138 = scalar_select %p137, %s16, 1
        %s139 = smul.addr %s138, 4
        %s140 = smul.addr %s139, 2
        %s141 = scalar_lea.vmem %s0, %s140
        %v143 = vld [vmem:[%s141] sm:$0x3]
        %v144 = vld [vmem:[%s1] sm:$0xf]
        %s145 = scalar_lea.vmem %s141, 2
        %v146 = vld [vmem:[%s145] sm:$0x3]
        %s147 = scalar_lea.vmem %s1, 4
        %v148 = vld [vmem:[%s147] sm:$0xf]
        %vm149 = vcmask 31744
        %v151 = vsel %vm149, %v148, 0
        %vm153 = vcmask 1041408
        %v155 = vsel %vm153, %v146, 0
        %157 = vmatpush.bf16.msra.mxu0 0
        %158 = vmatpush.bf16.msra.mxu0 0
        %159 = vmatpush.bf16.msra.mxu0 0
        %160 = vmatpush.bf16.msra.mxu0 0
        %161 = vmatpush.bf16.msra.mxu0 0
        %162 = vmatpush.bf16.msra.mxu0 0
        %163 = vmatpush.bf16.msra.mxu0 0
        %164 = vmatpush.bf16.msra.mxu0 %v155
        %165 = vmatmul.bf16.gmra.mxu0 %v151
        %v166 = vpop.f32.mrf.mxu0
        %v167 = vadd.f32 0.0, %v166
        %v168 = vpop.f32.mrf.mxu0
        %169 = vdwg.mxu0
        %v171 = vsel %vm149, %v144, 0
        %v174 = vsel %vm153, %v143, 0
        %176 = vmatpush.bf16.msra.mxu0 0
        %177 = vmatpush.bf16.msra.mxu0 0
        %178 = vmatpush.bf16.msra.mxu0 0
        %179 = vmatpush.bf16.msra.mxu0 0
        %180 = vmatpush.bf16.msra.mxu0 0
        %181 = vmatpush.bf16.msra.mxu0 0
        %182 = vmatpush.bf16.msra.mxu0 0
        %183 = vmatpush.bf16.msra.mxu0 %v174
        %184 = vmatmul.bf16.gmra.mxu0 %v171
        %v185 = vpop.f32.mrf.mxu0
        %v186 = vadd.f32 %v167, %v185
        %v187 = vpop.f32.mrf.mxu0
        %188 = vdwg.mxu0
        %s189 = scalar_lea.vmem %s1, 8
        %v190 = vld [vmem:[%s189] sm:$0xf]
        %191 = vst [vmem:[#allocation1] ss:$4 sm:$0xff] %v143
        %v192 = vld.sshfl [vmem:[#allocation1] sm:$0xff pattern:$0x73625140]
        %194 = vrot.lane.b32.xlu0 %v192, 127
        %v195 = vpop.permute.xlu0 %194
        %v197 = vsel %vm149, %v190, 0
        %v200 = vsel %vm153, %v195, 0
        %202 = vmatpush.bf16.msra.mxu0 0
        %203 = vmatpush.bf16.msra.mxu0 0
        %204 = vmatpush.bf16.msra.mxu0 0
        %205 = vmatpush.bf16.msra.mxu0 0
        %206 = vmatpush.bf16.msra.mxu0 0
        %207 = vmatpush.bf16.msra.mxu0 0
        %208 = vmatpush.bf16.msra.mxu0 0
        %209 = vmatpush.bf16.msra.mxu0 %v200
        %210 = vmatmul.bf16.gmra.mxu0 %v197
        %v211 = vpop.f32.mrf.mxu0
        %v212 = vadd.f32 0.0, %v211
        %v213 = vpop.f32.mrf.mxu0
        %214 = vdwg.mxu0
        %v215 = vadd.f32 %v186, %v212
        %v216 = vld [vmem:[%s145] sm:$0x3]
        %s217 = scalar_lea.vmem %s1, 12
        %v218 = vld [vmem:[%s217] sm:$0xf]
        %220 = vst [vmem:[#allocation1] ss:$4 sm:$0xff] %v216
        %v221 = vld.sshfl [vmem:[#allocation1] sm:$0xff pattern:$0x73625140]
        %223 = vrot.lane.b32.xlu0 %v221, 127
        %v224 = vpop.permute.xlu0 %223
        %v226 = vsel %vm149, %v218, 0
        %v229 = vsel %vm153, %v224, 0
        %231 = vmatpush.bf16.msra.mxu0 0
        %232 = vmatpush.bf16.msra.mxu0 0
        %233 = vmatpush.bf16.msra.mxu0 0
        %234 = vmatpush.bf16.msra.mxu0 0
        %235 = vmatpush.bf16.msra.mxu0 0
        %236 = vmatpush.bf16.msra.mxu0 0
        %237 = vmatpush.bf16.msra.mxu0 0
        %238 = vmatpush.bf16.msra.mxu0 %v229
        %239 = vmatmul.bf16.gmra.mxu0 %v226
        %v240 = vpop.f32.mrf.mxu0
        %v241 = vadd.f32 0.0, %v240
        %v242 = vpop.f32.mrf.mxu0
        %243 = vdwg.mxu0
        %v244 = vadd.f32 %v215, %v241
        %s245 = scalar_lea.vmem %s141, 4
        %v246 = vld [vmem:[%s245] sm:$0x3]
        %s247 = scalar_lea.vmem %s1, 16
        %v248 = vld [vmem:[%s247] sm:$0xf]
        %v250 = vsel %vm149, %v248, 0
        %v253 = vsel %vm153, %v246, 0
        %255 = vmatpush.bf16.msra.mxu0 0
        %256 = vmatpush.bf16.msra.mxu0 0
        %257 = vmatpush.bf16.msra.mxu0 0
        %258 = vmatpush.bf16.msra.mxu0 0
        %259 = vmatpush.bf16.msra.mxu0 0
        %260 = vmatpush.bf16.msra.mxu0 0
        %261 = vmatpush.bf16.msra.mxu0 0
        %262 = vmatpush.bf16.msra.mxu0 %v253
        %263 = vmatmul.bf16.gmra.mxu0 %v250
        %v264 = vpop.f32.mrf.mxu0
        %v265 = vadd.f32 0.0, %v264
        %v266 = vpop.f32.mrf.mxu0
        %267 = vdwg.mxu0
        %v268 = vadd.f32 %v244, %v265
        %s269 = scalar_lea.vmem %s141, 6
        %v270 = vld [vmem:[%s269] sm:$0x3]
        %s271 = scalar_lea.vmem %s1, 20
        %v272 = vld [vmem:[%s271] sm:$0xf]
        %v274 = vsel %vm149, %v272, 0
        %v277 = vsel %vm153, %v270, 0
        %279 = vmatpush.bf16.msra.mxu0 0
        %280 = vmatpush.bf16.msra.mxu0 0
        %281 = vmatpush.bf16.msra.mxu0 0
        %282 = vmatpush.bf16.msra.mxu0 0
        %283 = vmatpush.bf16.msra.mxu0 0
        %284 = vmatpush.bf16.msra.mxu0 0
        %285 = vmatpush.bf16.msra.mxu0 0
        %286 = vmatpush.bf16.msra.mxu0 %v277
        %287 = vmatmul.bf16.gmra.mxu0 %v274
        %v288 = vpop.f32.mrf.mxu0
        %v289 = vadd.f32 0.0, %v288
        %v290 = vpop.f32.mrf.mxu0
        %291 = vdwg.mxu0
        %v292 = vadd.f32 %v268, %v289
        %s293 = scalar_lea.vmem %s1, 24
        %v294 = vld [vmem:[%s293] sm:$0xf]
        %295 = vst [vmem:[#allocation1] ss:$4 sm:$0xff] %v246
        %v296 = vld.sshfl [vmem:[#allocation1] sm:$0xff pattern:$0x73625140]
        %298 = vrot.lane.b32.xlu0 %v296, 127
        %v299 = vpop.permute.xlu0 %298
        %v301 = vsel %vm149, %v294, 0
        %v304 = vsel %vm153, %v299, 0
        %306 = vmatpush.bf16.msra.mxu0 0
        %307 = vmatpush.bf16.msra.mxu0 0
        %308 = vmatpush.bf16.msra.mxu0 0
        %309 = vmatpush.bf16.msra.mxu0 0
        %310 = vmatpush.bf16.msra.mxu0 0
        %311 = vmatpush.bf16.msra.mxu0 0
        %312 = vmatpush.bf16.msra.mxu0 0
        %313 = vmatpush.bf16.msra.mxu0 %v304
        %314 = vmatmul.bf16.gmra.mxu0 %v301
        %v315 = vpop.f32.mrf.mxu0
        %v316 = vadd.f32 0.0, %v315
        %v317 = vpop.f32.mrf.mxu0
        %318 = vdwg.mxu0
        %v319 = vadd.f32 %v292, %v316
        %v320 = vld [vmem:[%s269] sm:$0x3]
        %s321 = scalar_lea.vmem %s1, 28
        %v322 = vld [vmem:[%s321] sm:$0xf]
        %324 = vst [vmem:[#allocation1] ss:$4 sm:$0xff] %v320
        %v325 = vld.sshfl [vmem:[#allocation1] sm:$0xff pattern:$0x73625140]
        %327 = vrot.lane.b32.xlu0 %v325, 127
        %v328 = vpop.permute.xlu0 %327
        %v330 = vsel %vm149, %v322, 0
        %v333 = vsel %vm153, %v328, 0
        %335 = vmatpush.bf16.msra.mxu0 0
        %336 = vmatpush.bf16.msra.mxu0 0
        %337 = vmatpush.bf16.msra.mxu0 0
        %338 = vmatpush.bf16.msra.mxu0 0
        %339 = vmatpush.bf16.msra.mxu0 0
        %340 = vmatpush.bf16.msra.mxu0 0
        %341 = vmatpush.bf16.msra.mxu0 0
        %342 = vmatpush.bf16.msra.mxu0 %v333
        %343 = vmatmul.bf16.gmra.mxu0 %v330
        %v344 = vpop.f32.mrf.mxu0
        %v345 = vadd.f32 0.0, %v344
        %v346 = vpop.f32.mrf.mxu0
        %347 = vdwg.mxu0
        %v348 = vadd.f32 %v319, %v345
        %v349 = vld [vmem:[%s141] sm:$0x3]
        %s350 = scalar_lea.vmem %s1, 32
        %v351 = vld [vmem:[%s350] sm:$0xf]
        %353 = vst [vmem:[#allocation1] ss:$4 sm:$0xff] %v349
        %v354 = vld.sshfl [vmem:[#allocation1] sm:$0xff pattern:$0x73625140]
        %356 = vrot.lane.b32.xlu0 %v354, 119
        %v357 = vpop.permute.xlu0 %356
        %v359 = vsel %vm149, %v351, 0
        %v362 = vsel %vm153, %v357, 0
        %364 = vmatpush.bf16.msra.mxu0 0
        %365 = vmatpush.bf16.msra.mxu0 0
        %366 = vmatpush.bf16.msra.mxu0 0
        %367 = vmatpush.bf16.msra.mxu0 0
        %368 = vmatpush.bf16.msra.mxu0 0
        %369 = vmatpush.bf16.msra.mxu0 0
        %370 = vmatpush.bf16.msra.mxu0 0
        %371 = vmatpush.bf16.msra.mxu0 %v362
        %372 = vmatmul.bf16.gmra.mxu0 %v359
        %v373 = vpop.f32.mrf.mxu0
        %v374 = vadd.f32 0.0, %v373
        %v375 = vpop.f32.mrf.mxu0
        %376 = vdwg.mxu0
        %v377 = vadd.f32 %v348, %v374
        %v378 = vld [vmem:[%s145] sm:$0x3]
        %s379 = scalar_lea.vmem %s1, 36
        %v380 = vld [vmem:[%s379] sm:$0xf]
        %382 = vst [vmem:[#allocation1] ss:$4 sm:$0xff] %v378
        %v383 = vld.sshfl [vmem:[#allocation1] sm:$0xff pattern:$0x73625140]
        %385 = vrot.lane.b32.xlu0 %v383, 119
        %v386 = vpop.permute.xlu0 %385
        %v388 = vsel %vm149, %v380, 0
        %v391 = vsel %vm153, %v386, 0
        %393 = vmatpush.bf16.msra.mxu0 0
        %394 = vmatpush.bf16.msra.mxu0 0
        %395 = vmatpush.bf16.msra.mxu0 0
        %396 = vmatpush.bf16.msra.mxu0 0
        %397 = vmatpush.bf16.msra.mxu0 0
        %398 = vmatpush.bf16.msra.mxu0 0
        %399 = vmatpush.bf16.msra.mxu0 0
        %400 = vmatpush.bf16.msra.mxu0 %v391
        %401 = vmatmul.bf16.gmra.mxu0 %v388
        %v402 = vpop.f32.mrf.mxu0
        %v403 = vadd.f32 0.0, %v402
        %v404 = vpop.f32.mrf.mxu0
        %405 = vdwg.mxu0
        %v406 = vadd.f32 %v377, %v403
        %v407 = vld [vmem:[%s141] sm:$0x3]
        %s408 = scalar_lea.vmem %s1, 40
        %v409 = vld [vmem:[%s408] sm:$0xf]
        %411 = vst [vmem:[#allocation1] ss:$4 sm:$0xff] %v407
        %v412 = vld.sshfl [vmem:[#allocation1] sm:$0xff pattern:$0x73625140]
        %414 = vrot.lane.b32.xlu0 %v412, 118
        %v415 = vpop.permute.xlu0 %414
        %v417 = vsel %vm149, %v409, 0
        %v420 = vsel %vm153, %v415, 0
        %422 = vmatpush.bf16.msra.mxu0 0
        %423 = vmatpush.bf16.msra.mxu0 0
        %424 = vmatpush.bf16.msra.mxu0 0
        %425 = vmatpush.bf16.msra.mxu0 0
        %426 = vmatpush.bf16.msra.mxu0 0
        %427 = vmatpush.bf16.msra.mxu0 0
        %428 = vmatpush.bf16.msra.mxu0 0
        %429 = vmatpush.bf16.msra.mxu0 %v420
        %430 = vmatmul.bf16.gmra.mxu0 %v417
        %v431 = vpop.f32.mrf.mxu0
        %v432 = vadd.f32 0.0, %v431
        %v433 = vpop.f32.mrf.mxu0
        %434 = vdwg.mxu0
        %v435 = vadd.f32 %v406, %v432
        %v436 = vld [vmem:[%s145] sm:$0x3]
        %s437 = scalar_lea.vmem %s1, 44
        %v438 = vld [vmem:[%s437] sm:$0xf]
        %440 = vst [vmem:[#allocation1] ss:$4 sm:$0xff] %v436
        %v441 = vld.sshfl [vmem:[#allocation1] sm:$0xff pattern:$0x73625140]
        %443 = vrot.lane.b32.xlu0 %v441, 118
        %v444 = vpop.permute.xlu0 %443
        %v446 = vsel %vm149, %v438, 0
        %v449 = vsel %vm153, %v444, 0
        %451 = vmatpush.bf16.msra.mxu0 0
        %452 = vmatpush.bf16.msra.mxu0 0
        %453 = vmatpush.bf16.msra.mxu0 0
        %454 = vmatpush.bf16.msra.mxu0 0
        %455 = vmatpush.bf16.msra.mxu0 0
        %456 = vmatpush.bf16.msra.mxu0 0
        %457 = vmatpush.bf16.msra.mxu0 0
        %458 = vmatpush.bf16.msra.mxu0 %v449
        %459 = vmatmul.bf16.gmra.mxu0 %v446
        %v460 = vpop.f32.mrf.mxu0
        %v461 = vadd.f32 0.0, %v460
        %v462 = vpop.f32.mrf.mxu0
        %463 = vdwg.mxu0
        %v464 = vadd.f32 %v435, %v461
        %v465 = vld [vmem:[%s245] sm:$0x3]
        %s466 = scalar_lea.vmem %s1, 48
        %v467 = vld [vmem:[%s466] sm:$0xf]
        %469 = vst [vmem:[#allocation1] ss:$4 sm:$0xff] %v465
        %v470 = vld.sshfl [vmem:[#allocation1] sm:$0xff pattern:$0x73625140]
        %472 = vrot.lane.b32.xlu0 %v470, 119
        %v473 = vpop.permute.xlu0 %472
        %v475 = vsel %vm149, %v467, 0
        %v478 = vsel %vm153, %v473, 0
        %480 = vmatpush.bf16.msra.mxu0 0
        %481 = vmatpush.bf16.msra.mxu0 0
        %482 = vmatpush.bf16.msra.mxu0 0
        %483 = vmatpush.bf16.msra.mxu0 0
        %484 = vmatpush.bf16.msra.mxu0 0
        %485 = vmatpush.bf16.msra.mxu0 0
        %486 = vmatpush.bf16.msra.mxu0 0
        %487 = vmatpush.bf16.msra.mxu0 %v478
        %488 = vmatmul.bf16.gmra.mxu0 %v475
        %v489 = vpop.f32.mrf.mxu0
        %v490 = vadd.f32 0.0, %v489
        %v491 = vpop.f32.mrf.mxu0
        %492 = vdwg.mxu0
        %v493 = vadd.f32 %v464, %v490
        %v494 = vld [vmem:[%s269] sm:$0x3]
        %s495 = scalar_lea.vmem %s1, 52
        %v496 = vld [vmem:[%s495] sm:$0xf]
        %498 = vst [vmem:[#allocation1] ss:$4 sm:$0xff] %v494
        %v499 = vld.sshfl [vmem:[#allocation1] sm:$0xff pattern:$0x73625140]
        %501 = vrot.lane.b32.xlu0 %v499, 119
        %v502 = vpop.permute.xlu0 %501
        %v504 = vsel %vm149, %v496, 0
        %v507 = vsel %vm153, %v502, 0
        %509 = vmatpush.bf16.msra.mxu0 0
        %510 = vmatpush.bf16.msra.mxu0 0
        %511 = vmatpush.bf16.msra.mxu0 0
        %512 = vmatpush.bf16.msra.mxu0 0
        %513 = vmatpush.bf16.msra.mxu0 0
        %514 = vmatpush.bf16.msra.mxu0 0
        %515 = vmatpush.bf16.msra.mxu0 0
        %516 = vmatpush.bf16.msra.mxu0 %v507
        %517 = vmatmul.bf16.gmra.mxu0 %v504
        %v518 = vpop.f32.mrf.mxu0
        %v519 = vadd.f32 0.0, %v518
        %v520 = vpop.f32.mrf.mxu0
        %521 = vdwg.mxu0
        %v522 = vadd.f32 %v493, %v519
        %v523 = vld [vmem:[%s245] sm:$0x3]
        %s524 = scalar_lea.vmem %s1, 56
        %v525 = vld [vmem:[%s524] sm:$0xf]
        %527 = vst [vmem:[#allocation1] ss:$4 sm:$0xff] %v523
        %v528 = vld.sshfl [vmem:[#allocation1] sm:$0xff pattern:$0x73625140]
        %530 = vrot.lane.b32.xlu0 %v528, 118
        %v531 = vpop.permute.xlu0 %530
        %v533 = vsel %vm149, %v525, 0
        %v536 = vsel %vm153, %v531, 0
        %538 = vmatpush.bf16.msra.mxu0 0
        %539 = vmatpush.bf16.msra.mxu0 0
        %540 = vmatpush.bf16.msra.mxu0 0
        %541 = vmatpush.bf16.msra.mxu0 0
        %542 = vmatpush.bf16.msra.mxu0 0
        %543 = vmatpush.bf16.msra.mxu0 0
        %544 = vmatpush.bf16.msra.mxu0 0
        %545 = vmatpush.bf16.msra.mxu0 %v536
        %546 = vmatmul.bf16.gmra.mxu0 %v533
        %v547 = vpop.f32.mrf.mxu0
        %v548 = vadd.f32 0.0, %v547
        %v549 = vpop.f32.mrf.mxu0
        %550 = vdwg.mxu0
        %v551 = vadd.f32 %v522, %v548
        %v552 = vld [vmem:[%s269] sm:$0x3]
        %s553 = scalar_lea.vmem %s1, 60
        %v554 = vld [vmem:[%s553] sm:$0xf]
        %556 = vst [vmem:[#allocation1] ss:$4 sm:$0xff] %v552
        %v557 = vld.sshfl [vmem:[#allocation1] sm:$0xff pattern:$0x73625140]
        %559 = vrot.lane.b32.xlu0 %v557, 118
        %v560 = vpop.permute.xlu0 %559
        %v562 = vsel %vm149, %v554, 0
        %v565 = vsel %vm153, %v560, 0
        %567 = vmatpush.bf16.msra.mxu0 0
        %568 = vmatpush.bf16.msra.mxu0 0
        %569 = vmatpush.bf16.msra.mxu0 0
        %570 = vmatpush.bf16.msra.mxu0 0
        %571 = vmatpush.bf16.msra.mxu0 0
        %572 = vmatpush.bf16.msra.mxu0 0
        %573 = vmatpush.bf16.msra.mxu0 0
        %574 = vmatpush.bf16.msra.mxu0 %v565
        %575 = vmatmul.bf16.gmra.mxu0 %v562
        %v576 = vpop.f32.mrf.mxu0
        %v577 = vadd.f32 0.0, %v576
        %v578 = vpop.f32.mrf.mxu0
        %579 = vdwg.mxu0
        %v580 = vadd.f32 %v551, %v577
        %vm581 = vcmask 293888
        %582 = vst.msk [vmem:[%s136] sm:$0xff] %vm581, %v580
        %v583 = vld [vmem:[%s141] sm:$0x3]
        %v584 = vld [vmem:[%s1] sm:$0xf]
        %v585 = vld [vmem:[%s145] sm:$0x3]
        %v586 = vld [vmem:[%s147] sm:$0xf]
        %588 = vst [vmem:[#allocation1] ss:$4 sm:$0xff] %v585
        %v589 = vld.sshfl [vmem:[#allocation1] sm:$0xff pattern:$0x73625140]
        %591 = vrot.lane.b32.xlu0 %v589, 92
        %v592 = vpop.permute.xlu0 %591
        %v594 = vsel %vm149, %v586, 0
        %v597 = vsel %vm153, %v592, 0
        %599 = vmatpush.bf16.msra.mxu0 0
        %600 = vmatpush.bf16.msra.mxu0 0
        %601 = vmatpush.bf16.msra.mxu0 0
        %602 = vmatpush.bf16.msra.mxu0 0
        %603 = vmatpush.bf16.msra.mxu0 0
        %604 = vmatpush.bf16.msra.mxu0 0
        %605 = vmatpush.bf16.msra.mxu0 0
        %606 = vmatpush.bf16.msra.mxu0 %v597
        %607 = vmatmul.bf16.gmra.mxu0 %v594
        %v608 = vpop.f32.mrf.mxu0
        %v609 = vadd.f32 0.0, %v608
        %v610 = vpop.f32.mrf.mxu0
        %611 = vdwg.mxu0
        %613 = vst [vmem:[#allocation1] ss:$4 sm:$0xff] %v583
        %v614 = vld.sshfl [vmem:[#allocation1] sm:$0xff pattern:$0x73625140]
        %616 = vrot.lane.b32.xlu0 %v614, 92
        %v617 = vpop.permute.xlu0 %616
        %v619 = vsel %vm149, %v584, 0
        %v622 = vsel %vm153, %v617, 0
        %624 = vmatpush.bf16.msra.mxu0 0
        %625 = vmatpush.bf16.msra.mxu0 0
        %626 = vmatpush.bf16.msra.mxu0 0
        %627 = vmatpush.bf16.msra.mxu0 0
        %628 = vmatpush.bf16.msra.mxu0 0
        %629 = vmatpush.bf16.msra.mxu0 0
        %630 = vmatpush.bf16.msra.mxu0 0
        %631 = vmatpush.bf16.msra.mxu0 %v622
        %632 = vmatmul.bf16.gmra.mxu0 %v619
        %v633 = vpop.f32.mrf.mxu0
        %v634 = vadd.f32 %v609, %v633
        %v635 = vpop.f32.mrf.mxu0
        %636 = vdwg.mxu0
        %v637 = vld [vmem:[%s141] sm:$0x3]
        %v638 = vld [vmem:[%s189] sm:$0xf]
        %640 = vst [vmem:[#allocation1] ss:$4 sm:$0xff] %v637
        %v641 = vld.sshfl [vmem:[#allocation1] sm:$0xff pattern:$0x73625140]
        %643 = vrot.lane.b32.xlu0 %v641, 91
        %v644 = vpop.permute.xlu0 %643
        %v646 = vsel %vm149, %v638, 0
        %v649 = vsel %vm153, %v644, 0
        %651 = vmatpush.bf16.msra.mxu0 0
        %652 = vmatpush.bf16.msra.mxu0 0
        %653 = vmatpush.bf16.msra.mxu0 0
        %654 = vmatpush.bf16.msra.mxu0 0
        %655 = vmatpush.bf16.msra.mxu0 0
        %656 = vmatpush.bf16.msra.mxu0 0
        %657 = vmatpush.bf16.msra.mxu0 0
        %658 = vmatpush.bf16.msra.mxu0 %v649
        %659 = vmatmul.bf16.gmra.mxu0 %v646
        %v660 = vpop.f32.mrf.mxu0
        %v661 = vadd.f32 0.0, %v660
        %v662 = vpop.f32.mrf.mxu0
        %663 = vdwg.mxu0
        %v664 = vadd.f32 %v634, %v661
        %v665 = vld [vmem:[%s145] sm:$0x3]
        %v666 = vld [vmem:[%s217] sm:$0xf]
        %668 = vst [vmem:[#allocation1] ss:$4 sm:$0xff] %v665
        %v669 = vld.sshfl [vmem:[#allocation1] sm:$0xff pattern:$0x73625140]
        %671 = vrot.lane.b32.xlu0 %v669, 91
        %v672 = vpop.permute.xlu0 %671
        %v674 = vsel %vm149, %v666, 0
        %v677 = vsel %vm153, %v672, 0
        %679 = vmatpush.bf16.msra.mxu0 0
        %680 = vmatpush.bf16.msra.mxu0 0
        %681 = vmatpush.bf16.msra.mxu0 0
        %682 = vmatpush.bf16.msra.mxu0 0
        %683 = vmatpush.bf16.msra.mxu0 0
        %684 = vmatpush.bf16.msra.mxu0 0
        %685 = vmatpush.bf16.msra.mxu0 0
        %686 = vmatpush.bf16.msra.mxu0 %v677
        %687 = vmatmul.bf16.gmra.mxu0 %v674
        %v688 = vpop.f32.mrf.mxu0
        %v689 = vadd.f32 0.0, %v688
        %v690 = vpop.f32.mrf.mxu0
        %691 = vdwg.mxu0
        %v692 = vadd.f32 %v664, %v689
        %v693 = vld [vmem:[%s245] sm:$0x3]
        %v694 = vld [vmem:[%s247] sm:$0xf]
        %696 = vst [vmem:[#allocation1] ss:$4 sm:$0xff] %v693
        %v697 = vld.sshfl [vmem:[#allocation1] sm:$0xff pattern:$0x73625140]
        %699 = vrot.lane.b32.xlu0 %v697, 92
        %v700 = vpop.permute.xlu0 %699
        %v702 = vsel %vm149, %v694, 0
        %v705 = vsel %vm153, %v700, 0
        %707 = vmatpush.bf16.msra.mxu0 0
        %708 = vmatpush.bf16.msra.mxu0 0
        %709 = vmatpush.bf16.msra.mxu0 0
        %710 = vmatpush.bf16.msra.mxu0 0
        %711 = vmatpush.bf16.msra.mxu0 0
        %712 = vmatpush.bf16.msra.mxu0 0
        %713 = vmatpush.bf16.msra.mxu0 0
        %714 = vmatpush.bf16.msra.mxu0 %v705
        %715 = vmatmul.bf16.gmra.mxu0 %v702
        %v716 = vpop.f32.mrf.mxu0
        %v717 = vadd.f32 0.0, %v716
        %v718 = vpop.f32.mrf.mxu0
        %719 = vdwg.mxu0
        %v720 = vadd.f32 %v692, %v717
        %v721 = vld [vmem:[%s269] sm:$0x3]
        %v722 = vld [vmem:[%s271] sm:$0xf]
        %724 = vst [vmem:[#allocation1] ss:$4 sm:$0xff] %v721
        %v725 = vld.sshfl [vmem:[#allocation1] sm:$0xff pattern:$0x73625140]
        %727 = vrot.lane.b32.xlu0 %v725, 92
        %v728 = vpop.permute.xlu0 %727
        %v730 = vsel %vm149, %v722, 0
        %v733 = vsel %vm153, %v728, 0
        %735 = vmatpush.bf16.msra.mxu0 0
        %736 = vmatpush.bf16.msra.mxu0 0
        %737 = vmatpush.bf16.msra.mxu0 0
        %738 = vmatpush.bf16.msra.mxu0 0
        %739 = vmatpush.bf16.msra.mxu0 0
        %740 = vmatpush.bf16.msra.mxu0 0
        %741 = vmatpush.bf16.msra.mxu0 0
        %742 = vmatpush.bf16.msra.mxu0 %v733
        %743 = vmatmul.bf16.gmra.mxu0 %v730
        %v744 = vpop.f32.mrf.mxu0
        %v745 = vadd.f32 0.0, %v744
        %v746 = vpop.f32.mrf.mxu0
        %747 = vdwg.mxu0
        %v748 = vadd.f32 %v720, %v745
        %v749 = vld [vmem:[%s245] sm:$0x3]
        %v750 = vld [vmem:[%s293] sm:$0xf]
        %752 = vst [vmem:[#allocation1] ss:$4 sm:$0xff] %v749
        %v753 = vld.sshfl [vmem:[#allocation1] sm:$0xff pattern:$0x73625140]
        %755 = vrot.lane.b32.xlu0 %v753, 91
        %v756 = vpop.permute.xlu0 %755
        %v758 = vsel %vm149, %v750, 0
        %v761 = vsel %vm153, %v756, 0
        %763 = vmatpush.bf16.msra.mxu0 0
        %764 = vmatpush.bf16.msra.mxu0 0
        %765 = vmatpush.bf16.msra.mxu0 0
        %766 = vmatpush.bf16.msra.mxu0 0
        %767 = vmatpush.bf16.msra.mxu0 0
        %768 = vmatpush.bf16.msra.mxu0 0
        %769 = vmatpush.bf16.msra.mxu0 0
        %770 = vmatpush.bf16.msra.mxu0 %v761
        %771 = vmatmul.bf16.gmra.mxu0 %v758
        %v772 = vpop.f32.mrf.mxu0
        %v773 = vadd.f32 0.0, %v772
        %v774 = vpop.f32.mrf.mxu0
        %775 = vdwg.mxu0
        %v776 = vadd.f32 %v748, %v773
        %v777 = vld [vmem:[%s269] sm:$0x3]
        %v778 = vld [vmem:[%s321] sm:$0xf]
        %780 = vst [vmem:[#allocation1] ss:$4 sm:$0xff] %v777
        %v781 = vld.sshfl [vmem:[#allocation1] sm:$0xff pattern:$0x73625140]
        %783 = vrot.lane.b32.xlu0 %v781, 91
        %v784 = vpop.permute.xlu0 %783
        %v786 = vsel %vm149, %v778, 0
        %v789 = vsel %vm153, %v784, 0
        %791 = vmatpush.bf16.msra.mxu0 0
        %792 = vmatpush.bf16.msra.mxu0 0
        %793 = vmatpush.bf16.msra.mxu0 0
        %794 = vmatpush.bf16.msra.mxu0 0
        %795 = vmatpush.bf16.msra.mxu0 0
        %796 = vmatpush.bf16.msra.mxu0 0
        %797 = vmatpush.bf16.msra.mxu0 0
        %798 = vmatpush.bf16.msra.mxu0 %v789
        %799 = vmatmul.bf16.gmra.mxu0 %v786
        %v800 = vpop.f32.mrf.mxu0
        %v801 = vadd.f32 0.0, %v800
        %v802 = vpop.f32.mrf.mxu0
        %803 = vdwg.mxu0
        %v804 = vadd.f32 %v776, %v801
        %v805 = vld [vmem:[%s141] sm:$0x3]
        %v806 = vld [vmem:[%s350] sm:$0xf]
        %808 = vst [vmem:[#allocation1] ss:$4 sm:$0xff] %v805
        %v809 = vld.sshfl [vmem:[#allocation1] sm:$0xff pattern:$0x73625140]
        %811 = vrot.lane.b32.xlu0 %v809, 83
        %v812 = vpop.permute.xlu0 %811
        %v814 = vsel %vm149, %v806, 0
        %v817 = vsel %vm153, %v812, 0
        %819 = vmatpush.bf16.msra.mxu0 0
        %820 = vmatpush.bf16.msra.mxu0 0
        %821 = vmatpush.bf16.msra.mxu0 0
        %822 = vmatpush.bf16.msra.mxu0 0
        %823 = vmatpush.bf16.msra.mxu0 0
        %824 = vmatpush.bf16.msra.mxu0 0
        %825 = vmatpush.bf16.msra.mxu0 0
        %826 = vmatpush.bf16.msra.mxu0 %v817
        %827 = vmatmul.bf16.gmra.mxu0 %v814
        %v828 = vpop.f32.mrf.mxu0
        %v829 = vadd.f32 0.0, %v828
        %v830 = vpop.f32.mrf.mxu0
        %831 = vdwg.mxu0
        %v832 = vadd.f32 %v804, %v829
        %v833 = vld [vmem:[%s145] sm:$0x3]
        %v834 = vld [vmem:[%s379] sm:$0xf]
        %836 = vst [vmem:[#allocation1] ss:$4 sm:$0xff] %v833
        %v837 = vld.sshfl [vmem:[#allocation1] sm:$0xff pattern:$0x73625140]
        %839 = vrot.lane.b32.xlu0 %v837, 83
        %v840 = vpop.permute.xlu0 %839
        %v842 = vsel %vm149, %v834, 0
        %v845 = vsel %vm153, %v840, 0
        %847 = vmatpush.bf16.msra.mxu0 0
        %848 = vmatpush.bf16.msra.mxu0 0
        %849 = vmatpush.bf16.msra.mxu0 0
        %850 = vmatpush.bf16.msra.mxu0 0
        %851 = vmatpush.bf16.msra.mxu0 0
        %852 = vmatpush.bf16.msra.mxu0 0
        %853 = vmatpush.bf16.msra.mxu0 0
        %854 = vmatpush.bf16.msra.mxu0 %v845
        %855 = vmatmul.bf16.gmra.mxu0 %v842
        %v856 = vpop.f32.mrf.mxu0
        %v857 = vadd.f32 0.0, %v856
        %v858 = vpop.f32.mrf.mxu0
        %859 = vdwg.mxu0
        %v860 = vadd.f32 %v832, %v857
        %v861 = vld [vmem:[%s141] sm:$0x3]
        %v862 = vld [vmem:[%s408] sm:$0xf]
        %864 = vst [vmem:[#allocation1] ss:$4 sm:$0xff] %v861
        %v865 = vld.sshfl [vmem:[#allocation1] sm:$0xff pattern:$0x73625140]
        %867 = vrot.lane.b32.xlu0 %v865, 82
        %v868 = vpop.permute.xlu0 %867
        %v870 = vsel %vm149, %v862, 0
        %v873 = vsel %vm153, %v868, 0
        %875 = vmatpush.bf16.msra.mxu0 0
        %876 = vmatpush.bf16.msra.mxu0 0
        %877 = vmatpush.bf16.msra.mxu0 0
        %878 = vmatpush.bf16.msra.mxu0 0
        %879 = vmatpush.bf16.msra.mxu0 0
        %880 = vmatpush.bf16.msra.mxu0 0
        %881 = vmatpush.bf16.msra.mxu0 0
        %882 = vmatpush.bf16.msra.mxu0 %v873
        %883 = vmatmul.bf16.gmra.mxu0 %v870
        %v884 = vpop.f32.mrf.mxu0
        %v885 = vadd.f32 0.0, %v884
        %v886 = vpop.f32.mrf.mxu0
        %887 = vdwg.mxu0
        %v888 = vadd.f32 %v860, %v885
        %v889 = vld [vmem:[%s145] sm:$0x3]
        %v890 = vld [vmem:[%s437] sm:$0xf]
        %892 = vst [vmem:[#allocation1] ss:$4 sm:$0xff] %v889
        %v893 = vld.sshfl [vmem:[#allocation1] sm:$0xff pattern:$0x73625140]
        %895 = vrot.lane.b32.xlu0 %v893, 82
        %v896 = vpop.permute.xlu0 %895
        %v898 = vsel %vm149, %v890, 0
        %v901 = vsel %vm153, %v896, 0
        %903 = vmatpush.bf16.msra.mxu0 0
        %904 = vmatpush.bf16.msra.mxu0 0
        %905 = vmatpush.bf16.msra.mxu0 0
        %906 = vmatpush.bf16.msra.mxu0 0
        %907 = vmatpush.bf16.msra.mxu0 0
        %908 = vmatpush.bf16.msra.mxu0 0
        %909 = vmatpush.bf16.msra.mxu0 0
        %910 = vmatpush.bf16.msra.mxu0 %v901
        %911 = vmatmul.bf16.gmra.mxu0 %v898
        %v912 = vpop.f32.mrf.mxu0
        %v913 = vadd.f32 0.0, %v912
        %v914 = vpop.f32.mrf.mxu0
        %915 = vdwg.mxu0
        %v916 = vadd.f32 %v888, %v913
        %v917 = vld [vmem:[%s245] sm:$0x3]
        %v918 = vld [vmem:[%s466] sm:$0xf]
        %920 = vst [vmem:[#allocation1] ss:$4 sm:$0xff] %v917
        %v921 = vld.sshfl [vmem:[#allocation1] sm:$0xff pattern:$0x73625140]
        %923 = vrot.lane.b32.xlu0 %v921, 83
        %v924 = vpop.permute.xlu0 %923
        %v926 = vsel %vm149, %v918, 0
        %v929 = vsel %vm153, %v924, 0
        %931 = vmatpush.bf16.msra.mxu0 0
        %932 = vmatpush.bf16.msra.mxu0 0
        %933 = vmatpush.bf16.msra.mxu0 0
        %934 = vmatpush.bf16.msra.mxu0 0
        %935 = vmatpush.bf16.msra.mxu0 0
        %936 = vmatpush.bf16.msra.mxu0 0
        %937 = vmatpush.bf16.msra.mxu0 0
        %938 = vmatpush.bf16.msra.mxu0 %v929
        %939 = vmatmul.bf16.gmra.mxu0 %v926
        %v940 = vpop.f32.mrf.mxu0
        %v941 = vadd.f32 0.0, %v940
        %v942 = vpop.f32.mrf.mxu0
        %943 = vdwg.mxu0
        %v944 = vadd.f32 %v916, %v941
        %v945 = vld [vmem:[%s269] sm:$0x3]
        %v946 = vld [vmem:[%s495] sm:$0xf]
        %948 = vst [vmem:[#allocation1] ss:$4 sm:$0xff] %v945
        %v949 = vld.sshfl [vmem:[#allocation1] sm:$0xff pattern:$0x73625140]
        %951 = vrot.lane.b32.xlu0 %v949, 83
        %v952 = vpop.permute.xlu0 %951
        %v954 = vsel %vm149, %v946, 0
        %v957 = vsel %vm153, %v952, 0
        %959 = vmatpush.bf16.msra.mxu0 0
        %960 = vmatpush.bf16.msra.mxu0 0
        %961 = vmatpush.bf16.msra.mxu0 0
        %962 = vmatpush.bf16.msra.mxu0 0
        %963 = vmatpush.bf16.msra.mxu0 0
        %964 = vmatpush.bf16.msra.mxu0 0
        %965 = vmatpush.bf16.msra.mxu0 0
        %966 = vmatpush.bf16.msra.mxu0 %v957
        %967 = vmatmul.bf16.gmra.mxu0 %v954
        %v968 = vpop.f32.mrf.mxu0
        %v969 = vadd.f32 0.0, %v968
        %v970 = vpop.f32.mrf.mxu0
        %971 = vdwg.mxu0
        %v972 = vadd.f32 %v944, %v969
        %v973 = vld [vmem:[%s245] sm:$0x3]
        %v974 = vld [vmem:[%s524] sm:$0xf]
        %976 = vst [vmem:[#allocation1] ss:$4 sm:$0xff] %v973
        %v977 = vld.sshfl [vmem:[#allocation1] sm:$0xff pattern:$0x73625140]
        %979 = vrot.lane.b32.xlu0 %v977, 82
        %v980 = vpop.permute.xlu0 %979
        %v982 = vsel %vm149, %v974, 0
        %v985 = vsel %vm153, %v980, 0
        %987 = vmatpush.bf16.msra.mxu0 0
        %988 = vmatpush.bf16.msra.mxu0 0
        %989 = vmatpush.bf16.msra.mxu0 0
        %990 = vmatpush.bf16.msra.mxu0 0
        %991 = vmatpush.bf16.msra.mxu0 0
        %992 = vmatpush.bf16.msra.mxu0 0
        %993 = vmatpush.bf16.msra.mxu0 0
        %994 = vmatpush.bf16.msra.mxu0 %v985
        %995 = vmatmul.bf16.gmra.mxu0 %v982
        %v996 = vpop.f32.mrf.mxu0
        %v997 = vadd.f32 0.0, %v996
        %v998 = vpop.f32.mrf.mxu0
        %999 = vdwg.mxu0
        %v1000 = vadd.f32 %v972, %v997
        %v1001 = vld [vmem:[%s269] sm:$0x3]
        %v1002 = vld [vmem:[%s553] sm:$0xf]
        %1004 = vst [vmem:[#allocation1] ss:$4 sm:$0xff] %v1001
        %v1005 = vld.sshfl [vmem:[#allocation1] sm:$0xff pattern:$0x73625140]
        %1007 = vrot.lane.b32.xlu0 %v1005, 82
        %v1008 = vpop.permute.xlu0 %1007
        %v1010 = vsel %vm149, %v1002, 0
        %v1013 = vsel %vm153, %v1008, 0
        %1015 = vmatpush.bf16.msra.mxu0 0
        %1016 = vmatpush.bf16.msra.mxu0 0
        %1017 = vmatpush.bf16.msra.mxu0 0
        %1018 = vmatpush.bf16.msra.mxu0 0
        %1019 = vmatpush.bf16.msra.mxu0 0
        %1020 = vmatpush.bf16.msra.mxu0 0
        %1021 = vmatpush.bf16.msra.mxu0 0
        %1022 = vmatpush.bf16.msra.mxu0 %v1013
        %1023 = vmatmul.bf16.gmra.mxu0 %v1010
        %v1024 = vpop.f32.mrf.mxu0
        %v1025 = vadd.f32 0.0, %v1024
        %v1026 = vpop.f32.mrf.mxu0
        %1027 = vdwg.mxu0
        %v1028 = vadd.f32 %v1000, %v1025
        %1030 = vrot.lane.b32.xlu0 %v1028, 36
        %v1031 = vpop.permute.xlu0 %1030
        %vm1033 = vcmask 589088
        %1034 = vst.msk [vmem:[%s136] sm:$0xff] %vm1033, %v1031
        %v1035 = vld [vmem:[%s136] sm:$0xff]
        %v1036 = vlaneseq
        %v1037 = vand.u32 %v1036, 127
        %vm1038 = vcmp.lt.s32.totalorder %v1037, 0
        %v1039 = vsub.s32 0, %v1037
        %v1040 = vsel %vm1038, %v1039, %v1037
        %v1041 = vand.u32 %v1040, 65535
        %v1042 = vshrl.u32 %v1040, 16
        %v1044 = vmul.u32 %v1041, 14564
        %v1045 = vmul.u32 %v1041, 58254
        %v1046 = vmul.u32 %v1042, 14564
        %v1047 = vmul.u32 %v1042, 58254
        %v1048 = vshll.u32 %v1045, 16
        %v1049 = vshrl.u32 %v1045, 16
        %v1050 = vshll.u32 %v1046, 16
        %v1051 = vshrl.u32 %v1046, 16
        %vm1052 = vc.u32 %v1044, %v1048
        %v1053 = vsel %vm1052, 1, 0
        %v1054 = vadd.s32 %v1044, %v1048
        %v1055 = vadd.s32 %v1047, %v1053
        %vm1056 = vc.u32 %v1054, %v1050
        %v1057 = vsel %vm1056, 1, 0
        %v1058 = vadd.s32 %v1054, %v1050
        %v1059 = vadd.s32 %v1055, %v1057
        %v1060 = vadd.s32 %v1059, %v1049
        %v1061 = vadd.s32 %v1060, %v1051
        %v1062 = vshrl.u32 %v1061, 3
        %v1063 = vmul.u32 %v1062, 9
        %v1064 = vsub.s32 %v1040, %v1063
        %v1065 = vsub.s32 0, %v1064
        %v1066 = vsel %vm1038, %v1065, %v1064
        %vm1067 = vcmp.ne.s32.totalorder %v1066, 0
        %vm1068 = vcmp.lt.s32.totalorder %v1066, 0
        %vm1069 = vmand %vm1068, %vm1067
        %v1070 = vadd.s32 %v1066, 9
        %v1071 = vsel %vm1069, %v1070, %v1066
        %vm1072 = vcmp.lt.s32.totalorder %v1071, 8
        %v1073 = vsel %vm1072, %v1035, 0.0
        %vm1074 = vcmask 588800
        %v1075 = vsel %vm1074, %v1073, 0.0
        %1076 = vadd.xlane.f32.xlu0 %v1075
        %v1077 = vpop.xlane.xlu0 %1076
        %v1078 = vrcp.pop 64.0
        %v1079 = vmul.f32 64.0, %v1078
        %v1080 = vsub.f32 1.0, %v1079
        %v1081 = vmul.f32 %v1078, %v1080
        %v1082 = vadd.f32 %v1078, %v1081
        %vm1083 = vweird.f32 %v1078
        %v1084 = vsel %vm1083, %v1078, %v1082
        %v1085 = vmul.f32 %v1077, %v1084
        %v1086 = vsub.f32 %v1035, %v1085
        %v1087 = vmul.f32 %v1086, %v1086
        %v1088 = vsel %vm1072, %v1087, 0.0
        %v1089 = vsel %vm1074, %v1088, 0.0
        %1090 = vadd.xlane.f32.xlu0 %v1089
        %v1091 = vpop.xlane.xlu0 %1090
        %v1092 = vmul.f32 %v1091, %v1084
        %v1093 = vadd.f32 %v1092, 1e-05
        %v1094 = vrsqrt.pop %v1093
        %v1095 = vmul.f32 %v1094, %v1093
        %v1096 = vmul.f32 %v1095, %v1094
        %v1097 = vmul.f32 0.5, %v1096
        %v1098 = vsub.f32 1.5, %v1097
        %v1099 = vmul.f32 %v1094, %v1098
        %vm1100 = vweird.f32 %v1093
        %vm1101 = vweird.f32 %v1094
        %vm1102 = vmor %vm1100, %vm1101
        %v1103 = vsel %vm1102, %v1094, %v1099
        %v1104 = vmul.f32 %v1086, %v1103
        %vm1105 = vcmp.ge.f32.partialorder %v1104, 0.0
        %v1106 = vmul.f32 %v1104, 0.2
        %v1107 = vsel %vm1105, %v1104, %v1106
        %1108 = vst.msk [vmem:[%s136] sm:$0xff] %vm1074, %v1107
        %s1109 = sand.u32 %s71, 1
        %s1110 = scalar_lea.sflag [#allocation3], %s1109
        %s1111 = sand.u32 %s71, 1
        %s1112 = smul.addr %s1111, 8
        %s1113 = scalar_lea.vmem [#allocation2], %s1112
        // Predicated region
        $region29: #{tpu_custom_call.1} parent=27 // pred_check
          %p1114 = pneg %p81
        $region30: #{tpu_custom_call.1} parent=27 // pred_check_branch
          %1116 = sbr.rel (%p1114) target = $region32
        $region31: #{tpu_custom_call.1} parent=27 // pred_region
          %1118 = vsyncadd %s1110, 0
          %s1119 = smul.addr %s16, 8
          %s1120 = scalar_lea.hbm %s2, %s1119
          %s1122 = sshll.u32 %s1113, 4
          %s1123 = int_to_ptr.vmem [resolvable:$true] %s1122
          %s1124 = sshll.u32 %s1120, 4
          %s1125 = int_to_ptr.hbm [resolvable:$true] %s1124
          %1127 = dma.vmem_to_hbm [thread:$0]  %s1123, 128, %s1125, %s1110
        $region32: #{tpu_custom_call.1} parent=27 // pred_fallthru
          _
      $region28: #{tpu_custom_call.1} parent=5 // pred_fallthru
        _
      %p1128 = scmp.le.s32.totalorder 2, %s11
      // Predicated region
      $region33: #{tpu_custom_call.1} parent=5 // pred_check
        %p1129 = pneg %p1128
      $region34: #{tpu_custom_call.1} parent=5 // pred_check_branch
        %1131 = sbr.rel (%p1129) target = $region36
      $region35: #{tpu_custom_call.1} parent=5 // pred_region
        %s1132 = ssub.s32 %s11, 2
        // Predicated region
        $region37: #{tpu_custom_call.1} parent=35 // pred_check
          %p1133 = pneg %p87
        $region38: #{tpu_custom_call.1} parent=35 // pred_check_branch
          %1135 = sbr.rel (%p1133) target = $region40
        $region39: #{tpu_custom_call.1} parent=35 // pred_region
          %s1136 = sand.u32 %s72, 1
          %s1137 = scalar_lea.sflag [#allocation3], %s1136
          %s1138 = sand.u32 %s72, 1
          %s1139 = smul.addr %s1138, 8
          %s1140 = scalar_lea.vmem [#allocation2], %s1139
          %1142 = dma.done %s1137, 128
        $region40: #{tpu_custom_call.1} parent=35 // pred_fallthru
          _
      $region36: #{tpu_custom_call.1} parent=5 // pred_fallthru
        _
    $region6: #{tpu_custom_call.1} parent=1 // loop_footer
      %s15 = sadd.s32 1, %s11
    $region7: #{tpu_custom_call.1} parent=1 // loop_footer_branch
      %10 = sbr.rel target = $region3
    $region8: #{tpu_custom_call.1} parent=1 // loop_exit
      _
    %1143 = vsyncpa [#allocation3], 1
    %s1144 = scalar_lea.sflag [#allocation3], 1
    %1145 = vsyncpa %s1144, 1

</llo_original>
